<compile_context>
chip_gen: v7x
topology: tpu7x:2x2x1
jax: 0.10.0
libtpu: 0.0.40
codegen_flags: <defaults>
</compile_context>

<pallas_src>
from functools import partial

import jax
import jax.numpy as jnp
from jax import lax
from jax.experimental import pallas as pl
from jax.experimental.pallas import tpu as pltpu


def _round_up(n, m):
    return (n + m - 1) // m * m


# ----------------------------------------------------------------------------
# Fused kernel: (conv3x3 + BN + SiLU) x 2 (+ residual), one batch image per step.
# ----------------------------------------------------------------------------
def _fused_bottleneck_kernel(x_ref, w1_ref, s1_ref, b1_ref, w2_ref, s2_ref, b2_ref,
                             o_ref, xpad_ref, hpad_ref, *,
                             H, W, K1, K2, P, add):
    """Refs:
      x_ref:    (1, C1, H*W)            input image, flattened spatial on lanes
      w*_ref:   (K*K, Cout, Cin)        per-tap weights (compute_dtype)
      s*/b*:    (Cout, 1)               folded BatchNorm scale / bias (f32)
      o_ref:    (1, C2, H*W)
      xpad_ref: (C1, P+H*W+P)  compute_dtype scratch (zero lane halo = row padding)
      hpad_ref: (C_, P+H*W+P)  compute_dtype scratch for the intermediate h
    """
    HW = H * W

    # Hoisted lane-column helper + column-wrap masks (shared by both convs;
    # only dx = -1 and dx = +1 for 3x3 kernels).
    col = lax.broadcasted_iota(jnp.int32, (1, HW), 1) % W
    dxs = set()
    for K in (K1, K2):
        r = K // 2
        dxs.update(range(-r, r + 1))
    masks = {dx: ((col + dx >= 0) & (col + dx < W)) for dx in sorted(dxs) if dx != 0}

    def conv_bn_silu(src_ref, w_ref, s_ref, b_ref, K):
        # K*K accumulated per-tap matmuls: no im2col concatenate is ever built.
        # Row (dy) spill lands in the zero lane halo; column (dx) wrap is masked.
        r = K // 2
        acc = None
        for ky in range(K):
            dy = ky - r
            for kx in range(K):
                dx = kx - r
                off = dy * W + dx
                t = src_ref[:, P + off: P + off + HW]        # (Cin, HW) compute_dtype
                if dx != 0:
                    t = jnp.where(masks[dx], t, 0.0)
                d = jnp.dot(w_ref[ky * K + kx], t,
                            preferred_element_type=jnp.float32)
                acc = d if acc is None else acc + d          # (Cout, HW) f32
        y = acc * s_ref[...] + b_ref[...]                    # folded BN (inference)
        return y * jax.nn.sigmoid(y)                         # SiLU (f32)

    c1 = x_ref.shape[1]
    c_mid = hpad_ref.shape[0]

    # Zero only the halo lanes each step (interior is fully overwritten below).
    # Do NOT guard with program_id == 0: under "parallel" semantics the second
    # TensorCore never executes step 0.
    if P > 0:
        xpad_ref[:, :P] = jnp.zeros((c1, P), xpad_ref.dtype)
        xpad_ref[:, P + HW:] = jnp.zeros((c1, P), xpad_ref.dtype)
        hpad_ref[:, :P] = jnp.zeros((c_mid, P), hpad_ref.dtype)
        hpad_ref[:, P + HW:] = jnp.zeros((c_mid, P), hpad_ref.dtype)

    # Stage x once as compute_dtype (single cast; taps are raw slices afterwards).
    xpad_ref[:, P:P + HW] = x_ref[0].astype(xpad_ref.dtype)

    h = conv_bn_silu(xpad_ref, w1_ref, s1_ref, b1_ref, K1)   # (c_, HW) f32
    hpad_ref[:, P:P + HW] = h.astype(hpad_ref.dtype)

    y = conv_bn_silu(hpad_ref, w2_ref, s2_ref, b2_ref, K2)   # (c2, HW) f32
    if add:
        y = y + x_ref[0].astype(jnp.float32)                 # full-precision shortcut
    o_ref[0] = y.astype(o_ref.dtype)


# ----------------------------------------------------------------------------
# Wrapper
# ----------------------------------------------------------------------------
def _per_tap_weights(w_hwio, compute_dtype):
    """(K, K, Cin, Cout) -> (K*K, Cout, Cin); tap index = ky*K + kx."""
    kh, kw, c_in, c_out = w_hwio.shape
    assert kh == kw, "square kernels only"
    return jnp.transpose(w_hwio, (0, 1, 3, 2)).reshape(kh * kw, c_out, c_in) \
              .astype(compute_dtype)


def _pick_vmem_limit(est_bytes):
    """Per-generation VMEM budget: at most ~3/4 of physical VMEM
    (64 MiB on v7x, 128 MiB on v5e/v6e), no larger than needed (+margin)."""
    cap = 64 * 1024 * 1024                     # conservative default (v7x)
    try:
        cap = int(pltpu.get_tpu_info().vmem_capacity_bytes)
    except Exception:
        pass
    want = max(2 * int(est_bytes) + (8 << 20), 32 << 20)
    return max(min(want, (cap * 3) // 4), 16 << 20)


def bottleneck_forward(params, x_nchw, shortcut=True, compute_dtype=jnp.bfloat16):
    """Bottleneck forward.  x_nchw: (B, C1, H, W) -> (B, C2, H, W)."""
    w1, w2 = params["w1"], params["w2"]
    K1, K2 = w1.shape[0], w2.shape[0]
    assert K1 % 2 == 1 and K2 % 2 == 1, "autopad p=k//2 implemented for odd k only"
    B, C1, H, W = x_nchw.shape
    C_ = w1.shape[-1]
    C2 = w2.shape[-1]
    assert w1.shape[2] == C1 and w2.shape[2] == C_
    HW = H * W
    add = bool(shortcut) and (C1 == C2)

    # Lane halo sized from W: taps shift by at most r*(W+1) flattened lanes.
    r_max = max(K1 // 2, K2 // 2)
    P = _round_up(r_max * (W + 1), 128) if r_max > 0 else 0
    Ltot = HW + 2 * P

    # Per-tap weights + folded BatchNorm (inference scale/bias).
    w1_t = _per_tap_weights(w1, compute_dtype)       # (K1*K1, C_, C1)
    w2_t = _per_tap_weights(w2, compute_dtype)       # (K2*K2, C2, C_)
    s1 = params["s1"].reshape(C_, 1).astype(jnp.float32)
    b1 = params["b1"].reshape(C_, 1).astype(jnp.float32)
    s2 = params["s2"].reshape(C2, 1).astype(jnp.float32)
    b2 = params["b2"].reshape(C2, 1).astype(jnp.float32)

    # NCHW already has spatial last -> (B, C, H*W) is a free reshape; keeps
    # H*W on the lane axis so loads and the output store are lane-dense.
    x_flat = x_nchw.reshape(B, C1, HW)

    kernel = partial(_fused_bottleneck_kernel, H=H, W=W, K1=K1, K2=K2, P=P, add=add)

    # Rough per-step working set -> generation-aware VMEM limit.
    cd_b = jnp.dtype(compute_dtype).itemsize
    x_b = jnp.dtype(x_nchw.dtype).itemsize
    est = ((C1 + C_) * Ltot * cd_b                       # padded scratches
           + 2 * (C1 * HW + C2 * HW) * x_b               # double-buffered in/out blocks
           + 2 * (int(w1_t.size) + int(w2_t.size)) * cd_b  # (double-buffered) weights
           + 2 * 2 * (C_ + C2) * 4                       # scales / biases
           + 4 * max(C_, C2) * HW)                       # f32 accumulator
    vmem_limit = _pick_vmem_limit(est)

    out = pl.pallas_call(
        kernel,
        out_shape=jax.ShapeDtypeStruct((B, C2, HW), x_nchw.dtype),
        grid=(B,),
        in_specs=[
            pl.BlockSpec((1, C1, HW), lambda b: (b, 0, 0)),
            pl.BlockSpec(w1_t.shape, lambda b: (0, 0, 0)),
            pl.BlockSpec((C_, 1), lambda b: (0, 0)),
            pl.BlockSpec((C_, 1), lambda b: (0, 0)),
            pl.BlockSpec(w2_t.shape, lambda b: (0, 0, 0)),
            pl.BlockSpec((C2, 1), lambda b: (0, 0)),
            pl.BlockSpec((C2, 1), lambda b: (0, 0)),
        ],
        out_specs=pl.BlockSpec((1, C2, HW), lambda b: (b, 0, 0)),
        scratch_shapes=[
            pltpu.VMEM((C1, Ltot), compute_dtype),
            pltpu.VMEM((C_, Ltot), compute_dtype),
        ],
        compiler_params=pltpu.CompilerParams(
            dimension_semantics=("parallel",),           # batch images are independent
            vmem_limit_bytes=vmem_limit,
        ),
    )(x_flat, w1_t, s1, b1, w2_t, s2, b2)
    return out.reshape(B, C2, H, W)


# ----------------------------------------------------------------------------
# Parameters (BatchNorm folded to inference scale/bias)
# ----------------------------------------------------------------------------
def fold_bn(gamma, beta, mean, var, eps=1e-5):
    scale = gamma / jnp.sqrt(var + eps)
    bias = beta - mean * scale
    return scale, bias


def init_bottleneck_params(key, c1, c2, e=0.5, k=(3, 3)):
    c_ = int(c2 * e)
    k1, k2, k3, k4 = jax.random.split(key, 4)
    # conv weights in HWIO layout (equivalent to PyTorch OIHW transposed).
    w1 = jax.random.normal(k1, (k[0], k[0], c1, c_), jnp.float32) * 0.1
    w2 = jax.random.normal(k2, (k[1], k[1], c_, c2), jnp.float32) * 0.1
    g1 = 1.0 + 0.1 * jax.random.normal(k3, (c_,), jnp.float32)
    be1 = 0.05 * jnp.arange(c_, dtype=jnp.float32)
    m1 = jnp.zeros((c_,), jnp.float32)
    v1 = jnp.ones((c_,), jnp.float32)
    g2 = 1.0 + 0.1 * jax.random.normal(k4, (c2,), jnp.float32)
    be2 = 0.05 * jnp.arange(c2, dtype=jnp.float32)
    m2 = jnp.zeros((c2,), jnp.float32)
    v2 = jnp.ones((c2,), jnp.float32)
    s1, b1 = fold_bn(g1, be1, m1, v1)
    s2, b2 = fold_bn(g2, be2, m2, v2)
    return dict(w1=w1, s1=s1, b1=b1, w2=w2, s2=s2, b2=b2)


# ----------------------------------------------------------------------------
# Pure-JAX reference for a silent self-check
# ----------------------------------------------------------------------------
def _ref_conv_bn_silu(x_nchw, w_hwio, s, b):
    y = lax.conv_general_dilated(
        x_nchw, w_hwio, window_strides=(1, 1), padding="SAME",
        dimension_numbers=("NCHW", "HWIO", "NCHW"))
    y = y * s[None, :, None, None] + b[None, :, None, None]
    return y * jax.nn.sigmoid(y)


def _ref_bottleneck(params, x_nchw, shortcut=True):
    h = _ref_conv_bn_silu(x_nchw, params["w1"], params["s1"], params["b1"])
    y = _ref_conv_bn_silu(h, params["w2"], params["s2"], params["b2"])
    if shortcut and x_nchw.shape[1] == y.shape[1]:
        y = y + x_nchw
    return y


if __name__ == "__main__":
    key = jax.random.PRNGKey(0)
    kx, kp, kp2 = jax.random.split(key, 3)

    # Case 1: c1 == c2 == 4 -> shortcut active.
    B, C, H, W = 2, 4, 16, 16
    x = jax.random.normal(kx, (B, C, H, W), jnp.float32)
    params = init_bottleneck_params(kp, c1=C, c2=C, e=0.5)
    ref = jax.block_until_ready(_ref_bottleneck(params, x, shortcut=True))

    # f32 MXU operands: structural check (tolerance covers TPU default matmul precision).
    out_f32 = jax.block_until_ready(
        bottleneck_forward(params, x, shortcut=True, compute_dtype=jnp.float32))
    assert out_f32.shape == (B, C, H, W)
    assert jnp.allclose(out_f32, ref, atol=2e-2, rtol=2e-2), "f32 kernel mismatch"

    # bf16 MXU operands, f32 accumulation + f32 epilogue: perf configuration.
    out_bf16 = jax.block_until_ready(
        bottleneck_forward(params, x, shortcut=True, compute_dtype=jnp.bfloat16))
    assert out_bf16.shape == (B, C, H, W)
    assert jnp.allclose(out_bf16, ref, atol=5e-2, rtol=5e-2), "bf16 kernel mismatch"

    # Case 2: c1 != c2 -> no shortcut.
    C2b = 8
    params2 = init_bottleneck_params(kp2, c1=C, c2=C2b, e=0.5)
    ref2 = jax.block_until_ready(_ref_bottleneck(params2, x, shortcut=True))
    out2 = jax.block_until_ready(
        bottleneck_forward(params2, x, shortcut=True, compute_dtype=jnp.bfloat16))
    assert out2.shape == (B, C2b, H, W)
    assert jnp.allclose(out2, ref2, atol=5e-2, rtol=5e-2), "no-shortcut kernel mismatch"

    print("KERNEL_OK")
</pallas_src>

<mosaic_0001>
module attributes {stable_mosaic.version = 11 : i64} {
  func.func @_fused_bottleneck_kernel(%arg0: i32, %arg1: memref<1x4x256xf32, #tpu.memory_space<vmem>>, %arg2: memref<9x2x4xf32, #tpu.memory_space<vmem>>, %arg3: memref<2x1xf32, #tpu.memory_space<vmem>>, %arg4: memref<2x1xf32, #tpu.memory_space<vmem>>, %arg5: memref<9x4x2xf32, #tpu.memory_space<vmem>>, %arg6: memref<4x1xf32, #tpu.memory_space<vmem>>, %arg7: memref<4x1xf32, #tpu.memory_space<vmem>>, %arg8: memref<1x4x256xf32, #tpu.memory_space<vmem>>, %arg9: memref<4x512xf32, #tpu.memory_space<vmem>>, %arg10: memref<2x512xf32, #tpu.memory_space<vmem>>) attributes {dimension_semantics = [#tpu.dimension_semantics<parallel>], iteration_bounds = array<i64: 2>, scalar_prefetch = 0 : i64, scratch_operands = 2 : i64, tpu.core_type = #tpu.core_type<tc>, window_params = [{transform_indices = @transform_0, window_bounds = array<i64: 1, 4, 256>}, {pipeline_mode = #tpu.pipeline_mode<synchronous>, transform_indices = @transform_1, window_bounds = array<i64: 9, 2, 4>}, {pipeline_mode = #tpu.pipeline_mode<synchronous>, transform_indices = @transform_2, window_bounds = array<i64: 2, 1>}, {pipeline_mode = #tpu.pipeline_mode<synchronous>, transform_indices = @transform_3, window_bounds = array<i64: 2, 1>}, {pipeline_mode = #tpu.pipeline_mode<synchronous>, transform_indices = @transform_4, window_bounds = array<i64: 9, 4, 2>}, {pipeline_mode = #tpu.pipeline_mode<synchronous>, transform_indices = @transform_5, window_bounds = array<i64: 4, 1>}, {pipeline_mode = #tpu.pipeline_mode<synchronous>, transform_indices = @transform_6, window_bounds = array<i64: 4, 1>}, {transform_indices = @transform_7, window_bounds = array<i64: 1, 4, 256>}]} {
    %0 = tpu.iota {dimensions = array<i32: 1>} : vector<1x256xi32>
    %c16_i32 = arith.constant 16 : i32
    %c0_i32 = arith.constant 0 : i32
    %1 = arith.cmpi eq, %c16_i32, %c0_i32 : i32
    %c1_i32 = arith.constant 1 : i32
    %2 = arith.select %1, %c1_i32, %c16_i32 : i32
    %3 = vector.broadcast %2 : i32 to vector<1x256xi32>
    %4 = arith.remsi %0, %3 : vector<1x256xi32>
    %c0_i32_0 = arith.constant 0 : i32
    %5 = vector.broadcast %c0_i32_0 : i32 to vector<1x256xi32>
    %6 = arith.cmpi ne, %4, %5 : vector<1x256xi32>
    %c0_i32_1 = arith.constant 0 : i32
    %7 = vector.broadcast %c0_i32_1 : i32 to vector<1x256xi32>
    %8 = arith.cmpi slt, %4, %7 : vector<1x256xi32>
    %c0_i32_2 = arith.constant 0 : i32
    %9 = arith.cmpi slt, %2, %c0_i32_2 : i32
    %10 = vector.broadcast %9 : i1 to vector<1x256xi1>
    %11 = vector.broadcast %10 : vector<1x256xi1> to vector<1x256xi1>
    %12 = arith.xori %8, %11 : vector<1x256xi1>
    %13 = arith.andi %12, %6 : vector<1x256xi1>
    %14 = vector.broadcast %2 : i32 to vector<1x256xi32>
    %15 = arith.addi %4, %14 : vector<1x256xi32>
    %16 = arith.select %13, %15, %4 : vector<1x256xi1>, vector<1x256xi32>
    %c-1_i32 = arith.constant -1 : i32
    %17 = vector.broadcast %c-1_i32 : i32 to vector<1x256xi32>
    %18 = arith.addi %16, %17 : vector<1x256xi32>
    %c0_i32_3 = arith.constant 0 : i32
    %19 = vector.broadcast %c0_i32_3 : i32 to vector<1x256xi32>
    %20 = arith.cmpi sge, %18, %19 : vector<1x256xi32>
    %c-1_i32_4 = arith.constant -1 : i32
    %21 = vector.broadcast %c-1_i32_4 : i32 to vector<1x256xi32>
    %22 = arith.addi %16, %21 : vector<1x256xi32>
    %c16_i32_5 = arith.constant 16 : i32
    %23 = vector.broadcast %c16_i32_5 : i32 to vector<1x256xi32>
    %24 = arith.cmpi slt, %22, %23 : vector<1x256xi32>
    %25 = arith.andi %20, %24 : vector<1x256xi1>
    %c1_i32_6 = arith.constant 1 : i32
    %26 = vector.broadcast %c1_i32_6 : i32 to vector<1x256xi32>
    %27 = arith.addi %16, %26 : vector<1x256xi32>
    %c0_i32_7 = arith.constant 0 : i32
    %28 = vector.broadcast %c0_i32_7 : i32 to vector<1x256xi32>
    %29 = arith.cmpi sge, %27, %28 : vector<1x256xi32>
    %c1_i32_8 = arith.constant 1 : i32
    %30 = vector.broadcast %c1_i32_8 : i32 to vector<1x256xi32>
    %31 = arith.addi %16, %30 : vector<1x256xi32>
    %c16_i32_9 = arith.constant 16 : i32
    %32 = vector.broadcast %c16_i32_9 : i32 to vector<1x256xi32>
    %33 = arith.cmpi slt, %31, %32 : vector<1x256xi32>
    %34 = arith.andi %29, %33 : vector<1x256xi1>
    %cst = arith.constant 0.000000e+00 : f32
    %35 = vector.broadcast %cst : f32 to vector<4x128xf32>
    %c0 = arith.constant 0 : index
    %c0_10 = arith.constant 0 : index
    %36 = vector.load %arg9[%c0, %c0_10] : memref<4x512xf32, #tpu.memory_space<vmem>>, vector<4x128xf32>
    tpu.vector_store %arg9[%c0, %c0_10], %35 {strides = array<i32>} : memref<4x512xf32, #tpu.memory_space<vmem>>, vector<4x128xf32>,
    %cst_11 = arith.constant 0.000000e+00 : f32
    %37 = vector.broadcast %cst_11 : f32 to vector<4x128xf32>
    %c0_12 = arith.constant 0 : index
    %c384 = arith.constant 384 : index
    %38 = vector.load %arg9[%c0_12, %c384] : memref<4x512xf32, #tpu.memory_space<vmem>>, vector<4x128xf32>
    tpu.vector_store %arg9[%c0_12, %c384], %37 {strides = array<i32>} : memref<4x512xf32, #tpu.memory_space<vmem>>, vector<4x128xf32>,
    %cst_13 = arith.constant 0.000000e+00 : f32
    %39 = vector.broadcast %cst_13 : f32 to vector<2x128xf32>
    %c0_14 = arith.constant 0 : index
    %c0_15 = arith.constant 0 : index
    %40 = vector.load %arg10[%c0_14, %c0_15] : memref<2x512xf32, #tpu.memory_space<vmem>>, vector<2x128xf32>
    tpu.vector_store %arg10[%c0_14, %c0_15], %39 {strides = array<i32>} : memref<2x512xf32, #tpu.memory_space<vmem>>, vector<2x128xf32>,
    %cst_16 = arith.constant 0.000000e+00 : f32
    %41 = vector.broadcast %cst_16 : f32 to vector<2x128xf32>
    %c0_17 = arith.constant 0 : index
    %c384_18 = arith.constant 384 : index
    %42 = vector.load %arg10[%c0_17, %c384_18] : memref<2x512xf32, #tpu.memory_space<vmem>>, vector<2x128xf32>
    tpu.vector_store %arg10[%c0_17, %c384_18], %41 {strides = array<i32>} : memref<2x512xf32, #tpu.memory_space<vmem>>, vector<2x128xf32>,
    %c0_19 = arith.constant 0 : index
    %c0_20 = arith.constant 0 : index
    %c0_21 = arith.constant 0 : index
    %43 = vector.load %arg1[%c0_19, %c0_20, %c0_21] : memref<1x4x256xf32, #tpu.memory_space<vmem>>, vector<1x4x256xf32>
    %44 = vector.shape_cast %43 : vector<1x4x256xf32> to vector<4x256xf32>
    %c0_22 = arith.constant 0 : index
    %c128 = arith.constant 128 : index
    %45 = vector.load %arg9[%c0_22, %c128] : memref<4x512xf32, #tpu.memory_space<vmem>>, vector<4x256xf32>
    tpu.vector_store %arg9[%c0_22, %c128], %44 {strides = array<i32>} : memref<4x512xf32, #tpu.memory_space<vmem>>, vector<4x256xf32>,
    %c0_23 = arith.constant 0 : index
    %c111 = arith.constant 111 : index
    %46 = vector.load %arg9[%c0_23, %c111] : memref<4x512xf32, #tpu.memory_space<vmem>>, vector<4x256xf32>
    %cst_24 = arith.constant 0.000000e+00 : f32
    %47 = vector.shape_cast %25 : vector<1x256xi1> to vector<1x256xi1>
    %48 = vector.broadcast %47 : vector<1x256xi1> to vector<4x256xi1>
    %49 = vector.broadcast %cst_24 : f32 to vector<4x256xf32>
    %50 = arith.select %48, %46, %49 : vector<4x256xi1>, vector<4x256xf32>
    %c0_25 = arith.constant 0 : index
    %c0_26 = arith.constant 0 : index
    %c0_27 = arith.constant 0 : index
    %51 = vector.load %arg2[%c0_25, %c0_26, %c0_27] : memref<9x2x4xf32, #tpu.memory_space<vmem>>, vector<1x2x4xf32>
    %52 = vector.shape_cast %51 : vector<1x2x4xf32> to vector<2x4xf32>
    %cst_28 = arith.constant dense<0.000000e+00> : vector<2x256xf32>
    %53 = tpu.matmul %52, %50, %cst_28 {dimension_numbers = #tpu.dot_dimension_numbers<[1], [0], [0], [1], [0, 0, 1, 1], [], []>} : vector<2x4xf32>, vector<4x256xf32>, vector<2x256xf32> -> vector<2x256xf32>
    %c0_29 = arith.constant 0 : index
    %c112 = arith.constant 112 : index
    %54 = vector.load %arg9[%c0_29, %c112] : memref<4x512xf32, #tpu.memory_space<vmem>>, vector<4x256xf32>
    %c1 = arith.constant 1 : index
    %c0_30 = arith.constant 0 : index
    %c0_31 = arith.constant 0 : index
    %55 = vector.load %arg2[%c1, %c0_30, %c0_31] : memref<9x2x4xf32, #tpu.memory_space<vmem>>, vector<1x2x4xf32>
    %56 = vector.shape_cast %55 : vector<1x2x4xf32> to vector<2x4xf32>
    %cst_32 = arith.constant dense<0.000000e+00> : vector<2x256xf32>
    %57 = tpu.matmul %56, %54, %cst_32 {dimension_numbers = #tpu.dot_dimension_numbers<[1], [0], [0], [1], [0, 0, 1, 1], [], []>} : vector<2x4xf32>, vector<4x256xf32>, vector<2x256xf32> -> vector<2x256xf32>
    %58 = arith.addf %53, %57 : vector<2x256xf32>
    %c0_33 = arith.constant 0 : index
    %c113 = arith.constant 113 : index
    %59 = vector.load %arg9[%c0_33, %c113] : memref<4x512xf32, #tpu.memory_space<vmem>>, vector<4x256xf32>
    %cst_34 = arith.constant 0.000000e+00 : f32
    %60 = vector.shape_cast %34 : vector<1x256xi1> to vector<1x256xi1>
    %61 = vector.broadcast %60 : vector<1x256xi1> to vector<4x256xi1>
    %62 = vector.broadcast %cst_34 : f32 to vector<4x256xf32>
    %63 = arith.select %61, %59, %62 : vector<4x256xi1>, vector<4x256xf32>
    %c2 = arith.constant 2 : index
    %c0_35 = arith.constant 0 : index
    %c0_36 = arith.constant 0 : index
    %64 = vector.load %arg2[%c2, %c0_35, %c0_36] : memref<9x2x4xf32, #tpu.memory_space<vmem>>, vector<1x2x4xf32>
    %65 = vector.shape_cast %64 : vector<1x2x4xf32> to vector<2x4xf32>
    %cst_37 = arith.constant dense<0.000000e+00> : vector<2x256xf32>
    %66 = tpu.matmul %65, %63, %cst_37 {dimension_numbers = #tpu.dot_dimension_numbers<[1], [0], [0], [1], [0, 0, 1, 1], [], []>} : vector<2x4xf32>, vector<4x256xf32>, vector<2x256xf32> -> vector<2x256xf32>
    %67 = arith.addf %58, %66 : vector<2x256xf32>
    %c0_38 = arith.constant 0 : index
    %c127 = arith.constant 127 : index
    %68 = vector.load %arg9[%c0_38, %c127] : memref<4x512xf32, #tpu.memory_space<vmem>>, vector<4x256xf32>
    %cst_39 = arith.constant 0.000000e+00 : f32
    %69 = vector.shape_cast %25 : vector<1x256xi1> to vector<1x256xi1>
    %70 = vector.broadcast %69 : vector<1x256xi1> to vector<4x256xi1>
    %71 = vector.broadcast %cst_39 : f32 to vector<4x256xf32>
    %72 = arith.select %70, %68, %71 : vector<4x256xi1>, vector<4x256xf32>
    %c3 = arith.constant 3 : index
    %c0_40 = arith.constant 0 : index
    %c0_41 = arith.constant 0 : index
    %73 = vector.load %arg2[%c3, %c0_40, %c0_41] : memref<9x2x4xf32, #tpu.memory_space<vmem>>, vector<1x2x4xf32>
    %74 = vector.shape_cast %73 : vector<1x2x4xf32> to vector<2x4xf32>
    %cst_42 = arith.constant dense<0.000000e+00> : vector<2x256xf32>
    %75 = tpu.matmul %74, %72, %cst_42 {dimension_numbers = #tpu.dot_dimension_numbers<[1], [0], [0], [1], [0, 0, 1, 1], [], []>} : vector<2x4xf32>, vector<4x256xf32>, vector<2x256xf32> -> vector<2x256xf32>
    %76 = arith.addf %67, %75 : vector<2x256xf32>
    %c0_43 = arith.constant 0 : index
    %c128_44 = arith.constant 128 : index
    %77 = vector.load %arg9[%c0_43, %c128_44] : memref<4x512xf32, #tpu.memory_space<vmem>>, vector<4x256xf32>
    %c4 = arith.constant 4 : index
    %c0_45 = arith.constant 0 : index
    %c0_46 = arith.constant 0 : index
    %78 = vector.load %arg2[%c4, %c0_45, %c0_46] : memref<9x2x4xf32, #tpu.memory_space<vmem>>, vector<1x2x4xf32>
    %79 = vector.shape_cast %78 : vector<1x2x4xf32> to vector<2x4xf32>
    %cst_47 = arith.constant dense<0.000000e+00> : vector<2x256xf32>
    %80 = tpu.matmul %79, %77, %cst_47 {dimension_numbers = #tpu.dot_dimension_numbers<[1], [0], [0], [1], [0, 0, 1, 1], [], []>} : vector<2x4xf32>, vector<4x256xf32>, vector<2x256xf32> -> vector<2x256xf32>
    %81 = arith.addf %76, %80 : vector<2x256xf32>
    %c0_48 = arith.constant 0 : index
    %c129 = arith.constant 129 : index
    %82 = vector.load %arg9[%c0_48, %c129] : memref<4x512xf32, #tpu.memory_space<vmem>>, vector<4x256xf32>
    %cst_49 = arith.constant 0.000000e+00 : f32
    %83 = vector.shape_cast %34 : vector<1x256xi1> to vector<1x256xi1>
    %84 = vector.broadcast %83 : vector<1x256xi1> to vector<4x256xi1>
    %85 = vector.broadcast %cst_49 : f32 to vector<4x256xf32>
    %86 = arith.select %84, %82, %85 : vector<4x256xi1>, vector<4x256xf32>
    %c5 = arith.constant 5 : index
    %c0_50 = arith.constant 0 : index
    %c0_51 = arith.constant 0 : index
    %87 = vector.load %arg2[%c5, %c0_50, %c0_51] : memref<9x2x4xf32, #tpu.memory_space<vmem>>, vector<1x2x4xf32>
    %88 = vector.shape_cast %87 : vector<1x2x4xf32> to vector<2x4xf32>
    %cst_52 = arith.constant dense<0.000000e+00> : vector<2x256xf32>
    %89 = tpu.matmul %88, %86, %cst_52 {dimension_numbers = #tpu.dot_dimension_numbers<[1], [0], [0], [1], [0, 0, 1, 1], [], []>} : vector<2x4xf32>, vector<4x256xf32>, vector<2x256xf32> -> vector<2x256xf32>
    %90 = arith.addf %81, %89 : vector<2x256xf32>
    %c0_53 = arith.constant 0 : index
    %c143 = arith.constant 143 : index
    %91 = vector.load %arg9[%c0_53, %c143] : memref<4x512xf32, #tpu.memory_space<vmem>>, vector<4x256xf32>
    %cst_54 = arith.constant 0.000000e+00 : f32
    %92 = vector.shape_cast %25 : vector<1x256xi1> to vector<1x256xi1>
    %93 = vector.broadcast %92 : vector<1x256xi1> to vector<4x256xi1>
    %94 = vector.broadcast %cst_54 : f32 to vector<4x256xf32>
    %95 = arith.select %93, %91, %94 : vector<4x256xi1>, vector<4x256xf32>
    %c6 = arith.constant 6 : index
    %c0_55 = arith.constant 0 : index
    %c0_56 = arith.constant 0 : index
    %96 = vector.load %arg2[%c6, %c0_55, %c0_56] : memref<9x2x4xf32, #tpu.memory_space<vmem>>, vector<1x2x4xf32>
    %97 = vector.shape_cast %96 : vector<1x2x4xf32> to vector<2x4xf32>
    %cst_57 = arith.constant dense<0.000000e+00> : vector<2x256xf32>
    %98 = tpu.matmul %97, %95, %cst_57 {dimension_numbers = #tpu.dot_dimension_numbers<[1], [0], [0], [1], [0, 0, 1, 1], [], []>} : vector<2x4xf32>, vector<4x256xf32>, vector<2x256xf32> -> vector<2x256xf32>
    %99 = arith.addf %90, %98 : vector<2x256xf32>
    %c0_58 = arith.constant 0 : index
    %c144 = arith.constant 144 : index
    %100 = vector.load %arg9[%c0_58, %c144] : memref<4x512xf32, #tpu.memory_space<vmem>>, vector<4x256xf32>
    %c7 = arith.constant 7 : index
    %c0_59 = arith.constant 0 : index
    %c0_60 = arith.constant 0 : index
    %101 = vector.load %arg2[%c7, %c0_59, %c0_60] : memref<9x2x4xf32, #tpu.memory_space<vmem>>, vector<1x2x4xf32>
    %102 = vector.shape_cast %101 : vector<1x2x4xf32> to vector<2x4xf32>
    %cst_61 = arith.constant dense<0.000000e+00> : vector<2x256xf32>
    %103 = tpu.matmul %102, %100, %cst_61 {dimension_numbers = #tpu.dot_dimension_numbers<[1], [0], [0], [1], [0, 0, 1, 1], [], []>} : vector<2x4xf32>, vector<4x256xf32>, vector<2x256xf32> -> vector<2x256xf32>
    %104 = arith.addf %99, %103 : vector<2x256xf32>
    %c0_62 = arith.constant 0 : index
    %c145 = arith.constant 145 : index
    %105 = vector.load %arg9[%c0_62, %c145] : memref<4x512xf32, #tpu.memory_space<vmem>>, vector<4x256xf32>
    %cst_63 = arith.constant 0.000000e+00 : f32
    %106 = vector.shape_cast %34 : vector<1x256xi1> to vector<1x256xi1>
    %107 = vector.broadcast %106 : vector<1x256xi1> to vector<4x256xi1>
    %108 = vector.broadcast %cst_63 : f32 to vector<4x256xf32>
    %109 = arith.select %107, %105, %108 : vector<4x256xi1>, vector<4x256xf32>
    %c8 = arith.constant 8 : index
    %c0_64 = arith.constant 0 : index
    %c0_65 = arith.constant 0 : index
    %110 = vector.load %arg2[%c8, %c0_64, %c0_65] : memref<9x2x4xf32, #tpu.memory_space<vmem>>, vector<1x2x4xf32>
    %111 = vector.shape_cast %110 : vector<1x2x4xf32> to vector<2x4xf32>
    %cst_66 = arith.constant dense<0.000000e+00> : vector<2x256xf32>
    %112 = tpu.matmul %111, %109, %cst_66 {dimension_numbers = #tpu.dot_dimension_numbers<[1], [0], [0], [1], [0, 0, 1, 1], [], []>} : vector<2x4xf32>, vector<4x256xf32>, vector<2x256xf32> -> vector<2x256xf32>
    %113 = arith.addf %104, %112 : vector<2x256xf32>
    %c0_67 = arith.constant 0 : index
    %c0_68 = arith.constant 0 : index
    %114 = vector.load %arg3[%c0_67, %c0_68] : memref<2x1xf32, #tpu.memory_space<vmem>>, vector<2x1xf32>
    %115 = vector.broadcast %114 : vector<2x1xf32> to vector<2x256xf32>
    %116 = arith.mulf %113, %115 : vector<2x256xf32>
    %c0_69 = arith.constant 0 : index
    %c0_70 = arith.constant 0 : index
    %117 = vector.load %arg4[%c0_69, %c0_70] : memref<2x1xf32, #tpu.memory_space<vmem>>, vector<2x1xf32>
    %118 = vector.broadcast %117 : vector<2x1xf32> to vector<2x256xf32>
    %119 = arith.addf %116, %118 : vector<2x256xf32>
    %120 = arith.negf %119 : vector<2x256xf32>
    %121 = math.exp %120 : vector<2x256xf32>
    %cst_71 = arith.constant 1.000000e+00 : f32
    %122 = vector.broadcast %cst_71 : f32 to vector<2x256xf32>
    %123 = arith.addf %122, %121 : vector<2x256xf32>
    %124 = arith.divf %122, %123 : vector<2x256xf32>
    %125 = arith.mulf %119, %124 : vector<2x256xf32>
    %c0_72 = arith.constant 0 : index
    %c128_73 = arith.constant 128 : index
    %126 = vector.load %arg10[%c0_72, %c128_73] : memref<2x512xf32, #tpu.memory_space<vmem>>, vector<2x256xf32>
    tpu.vector_store %arg10[%c0_72, %c128_73], %125 {strides = array<i32>} : memref<2x512xf32, #tpu.memory_space<vmem>>, vector<2x256xf32>,
    %c0_74 = arith.constant 0 : index
    %c111_75 = arith.constant 111 : index
    %127 = vector.load %arg10[%c0_74, %c111_75] : memref<2x512xf32, #tpu.memory_space<vmem>>, vector<2x256xf32>
    %cst_76 = arith.constant 0.000000e+00 : f32
    %128 = vector.shape_cast %25 : vector<1x256xi1> to vector<1x256xi1>
    %129 = vector.broadcast %128 : vector<1x256xi1> to vector<2x256xi1>
    %130 = vector.broadcast %cst_76 : f32 to vector<2x256xf32>
    %131 = arith.select %129, %127, %130 : vector<2x256xi1>, vector<2x256xf32>
    %c0_77 = arith.constant 0 : index
    %c0_78 = arith.constant 0 : index
    %c0_79 = arith.constant 0 : index
    %132 = vector.load %arg5[%c0_77, %c0_78, %c0_79] : memref<9x4x2xf32, #tpu.memory_space<vmem>>, vector<1x4x2xf32>
    %133 = vector.shape_cast %132 : vector<1x4x2xf32> to vector<4x2xf32>
    %cst_80 = arith.constant dense<0.000000e+00> : vector<4x256xf32>
    %134 = tpu.matmul %133, %131, %cst_80 {dimension_numbers = #tpu.dot_dimension_numbers<[1], [0], [0], [1], [0, 0, 1, 1], [], []>} : vector<4x2xf32>, vector<2x256xf32>, vector<4x256xf32> -> vector<4x256xf32>
    %c0_81 = arith.constant 0 : index
    %c112_82 = arith.constant 112 : index
    %135 = vector.load %arg10[%c0_81, %c112_82] : memref<2x512xf32, #tpu.memory_space<vmem>>, vector<2x256xf32>
    %c1_83 = arith.constant 1 : index
    %c0_84 = arith.constant 0 : index
    %c0_85 = arith.constant 0 : index
    %136 = vector.load %arg5[%c1_83, %c0_84, %c0_85] : memref<9x4x2xf32, #tpu.memory_space<vmem>>, vector<1x4x2xf32>
    %137 = vector.shape_cast %136 : vector<1x4x2xf32> to vector<4x2xf32>
    %cst_86 = arith.constant dense<0.000000e+00> : vector<4x256xf32>
    %138 = tpu.matmul %137, %135, %cst_86 {dimension_numbers = #tpu.dot_dimension_numbers<[1], [0], [0], [1], [0, 0, 1, 1], [], []>} : vector<4x2xf32>, vector<2x256xf32>, vector<4x256xf32> -> vector<4x256xf32>
    %139 = arith.addf %134, %138 : vector<4x256xf32>
    %c0_87 = arith.constant 0 : index
    %c113_88 = arith.constant 113 : index
    %140 = vector.load %arg10[%c0_87, %c113_88] : memref<2x512xf32, #tpu.memory_space<vmem>>, vector<2x256xf32>
    %cst_89 = arith.constant 0.000000e+00 : f32
    %141 = vector.shape_cast %34 : vector<1x256xi1> to vector<1x256xi1>
    %142 = vector.broadcast %141 : vector<1x256xi1> to vector<2x256xi1>
    %143 = vector.broadcast %cst_89 : f32 to vector<2x256xf32>
    %144 = arith.select %142, %140, %143 : vector<2x256xi1>, vector<2x256xf32>
    %c2_90 = arith.constant 2 : index
    %c0_91 = arith.constant 0 : index
    %c0_92 = arith.constant 0 : index
    %145 = vector.load %arg5[%c2_90, %c0_91, %c0_92] : memref<9x4x2xf32, #tpu.memory_space<vmem>>, vector<1x4x2xf32>
    %146 = vector.shape_cast %145 : vector<1x4x2xf32> to vector<4x2xf32>
    %cst_93 = arith.constant dense<0.000000e+00> : vector<4x256xf32>
    %147 = tpu.matmul %146, %144, %cst_93 {dimension_numbers = #tpu.dot_dimension_numbers<[1], [0], [0], [1], [0, 0, 1, 1], [], []>} : vector<4x2xf32>, vector<2x256xf32>, vector<4x256xf32> -> vector<4x256xf32>
    %148 = arith.addf %139, %147 : vector<4x256xf32>
    %c0_94 = arith.constant 0 : index
    %c127_95 = arith.constant 127 : index
    %149 = vector.load %arg10[%c0_94, %c127_95] : memref<2x512xf32, #tpu.memory_space<vmem>>, vector<2x256xf32>
    %cst_96 = arith.constant 0.000000e+00 : f32
    %150 = vector.shape_cast %25 : vector<1x256xi1> to vector<1x256xi1>
    %151 = vector.broadcast %150 : vector<1x256xi1> to vector<2x256xi1>
    %152 = vector.broadcast %cst_96 : f32 to vector<2x256xf32>
    %153 = arith.select %151, %149, %152 : vector<2x256xi1>, vector<2x256xf32>
    %c3_97 = arith.constant 3 : index
    %c0_98 = arith.constant 0 : index
    %c0_99 = arith.constant 0 : index
    %154 = vector.load %arg5[%c3_97, %c0_98, %c0_99] : memref<9x4x2xf32, #tpu.memory_space<vmem>>, vector<1x4x2xf32>
    %155 = vector.shape_cast %154 : vector<1x4x2xf32> to vector<4x2xf32>
    %cst_100 = arith.constant dense<0.000000e+00> : vector<4x256xf32>
    %156 = tpu.matmul %155, %153, %cst_100 {dimension_numbers = #tpu.dot_dimension_numbers<[1], [0], [0], [1], [0, 0, 1, 1], [], []>} : vector<4x2xf32>, vector<2x256xf32>, vector<4x256xf32> -> vector<4x256xf32>
    %157 = arith.addf %148, %156 : vector<4x256xf32>
    %c0_101 = arith.constant 0 : index
    %c128_102 = arith.constant 128 : index
    %158 = vector.load %arg10[%c0_101, %c128_102] : memref<2x512xf32, #tpu.memory_space<vmem>>, vector<2x256xf32>
    %c4_103 = arith.constant 4 : index
    %c0_104 = arith.constant 0 : index
    %c0_105 = arith.constant 0 : index
    %159 = vector.load %arg5[%c4_103, %c0_104, %c0_105] : memref<9x4x2xf32, #tpu.memory_space<vmem>>, vector<1x4x2xf32>
    %160 = vector.shape_cast %159 : vector<1x4x2xf32> to vector<4x2xf32>
    %cst_106 = arith.constant dense<0.000000e+00> : vector<4x256xf32>
    %161 = tpu.matmul %160, %158, %cst_106 {dimension_numbers = #tpu.dot_dimension_numbers<[1], [0], [0], [1], [0, 0, 1, 1], [], []>} : vector<4x2xf32>, vector<2x256xf32>, vector<4x256xf32> -> vector<4x256xf32>
    %162 = arith.addf %157, %161 : vector<4x256xf32>
    %c0_107 = arith.constant 0 : index
    %c129_108 = arith.constant 129 : index
    %163 = vector.load %arg10[%c0_107, %c129_108] : memref<2x512xf32, #tpu.memory_space<vmem>>, vector<2x256xf32>
    %cst_109 = arith.constant 0.000000e+00 : f32
    %164 = vector.shape_cast %34 : vector<1x256xi1> to vector<1x256xi1>
    %165 = vector.broadcast %164 : vector<1x256xi1> to vector<2x256xi1>
    %166 = vector.broadcast %cst_109 : f32 to vector<2x256xf32>
    %167 = arith.select %165, %163, %166 : vector<2x256xi1>, vector<2x256xf32>
    %c5_110 = arith.constant 5 : index
    %c0_111 = arith.constant 0 : index
    %c0_112 = arith.constant 0 : index
    %168 = vector.load %arg5[%c5_110, %c0_111, %c0_112] : memref<9x4x2xf32, #tpu.memory_space<vmem>>, vector<1x4x2xf32>
    %169 = vector.shape_cast %168 : vector<1x4x2xf32> to vector<4x2xf32>
    %cst_113 = arith.constant dense<0.000000e+00> : vector<4x256xf32>
    %170 = tpu.matmul %169, %167, %cst_113 {dimension_numbers = #tpu.dot_dimension_numbers<[1], [0], [0], [1], [0, 0, 1, 1], [], []>} : vector<4x2xf32>, vector<2x256xf32>, vector<4x256xf32> -> vector<4x256xf32>
    %171 = arith.addf %162, %170 : vector<4x256xf32>
    %c0_114 = arith.constant 0 : index
    %c143_115 = arith.constant 143 : index
    %172 = vector.load %arg10[%c0_114, %c143_115] : memref<2x512xf32, #tpu.memory_space<vmem>>, vector<2x256xf32>
    %cst_116 = arith.constant 0.000000e+00 : f32
    %173 = vector.shape_cast %25 : vector<1x256xi1> to vector<1x256xi1>
    %174 = vector.broadcast %173 : vector<1x256xi1> to vector<2x256xi1>
    %175 = vector.broadcast %cst_116 : f32 to vector<2x256xf32>
    %176 = arith.select %174, %172, %175 : vector<2x256xi1>, vector<2x256xf32>
    %c6_117 = arith.constant 6 : index
    %c0_118 = arith.constant 0 : index
    %c0_119 = arith.constant 0 : index
    %177 = vector.load %arg5[%c6_117, %c0_118, %c0_119] : memref<9x4x2xf32, #tpu.memory_space<vmem>>, vector<1x4x2xf32>
    %178 = vector.shape_cast %177 : vector<1x4x2xf32> to vector<4x2xf32>
    %cst_120 = arith.constant dense<0.000000e+00> : vector<4x256xf32>
    %179 = tpu.matmul %178, %176, %cst_120 {dimension_numbers = #tpu.dot_dimension_numbers<[1], [0], [0], [1], [0, 0, 1, 1], [], []>} : vector<4x2xf32>, vector<2x256xf32>, vector<4x256xf32> -> vector<4x256xf32>
    %180 = arith.addf %171, %179 : vector<4x256xf32>
    %c0_121 = arith.constant 0 : index
    %c144_122 = arith.constant 144 : index
    %181 = vector.load %arg10[%c0_121, %c144_122] : memref<2x512xf32, #tpu.memory_space<vmem>>, vector<2x256xf32>
    %c7_123 = arith.constant 7 : index
    %c0_124 = arith.constant 0 : index
    %c0_125 = arith.constant 0 : index
    %182 = vector.load %arg5[%c7_123, %c0_124, %c0_125] : memref<9x4x2xf32, #tpu.memory_space<vmem>>, vector<1x4x2xf32>
    %183 = vector.shape_cast %182 : vector<1x4x2xf32> to vector<4x2xf32>
    %cst_126 = arith.constant dense<0.000000e+00> : vector<4x256xf32>
    %184 = tpu.matmul %183, %181, %cst_126 {dimension_numbers = #tpu.dot_dimension_numbers<[1], [0], [0], [1], [0, 0, 1, 1], [], []>} : vector<4x2xf32>, vector<2x256xf32>, vector<4x256xf32> -> vector<4x256xf32>
    %185 = arith.addf %180, %184 : vector<4x256xf32>
    %c0_127 = arith.constant 0 : index
    %c145_128 = arith.constant 145 : index
    %186 = vector.load %arg10[%c0_127, %c145_128] : memref<2x512xf32, #tpu.memory_space<vmem>>, vector<2x256xf32>
    %cst_129 = arith.constant 0.000000e+00 : f32
    %187 = vector.shape_cast %34 : vector<1x256xi1> to vector<1x256xi1>
    %188 = vector.broadcast %187 : vector<1x256xi1> to vector<2x256xi1>
    %189 = vector.broadcast %cst_129 : f32 to vector<2x256xf32>
    %190 = arith.select %188, %186, %189 : vector<2x256xi1>, vector<2x256xf32>
    %c8_130 = arith.constant 8 : index
    %c0_131 = arith.constant 0 : index
    %c0_132 = arith.constant 0 : index
    %191 = vector.load %arg5[%c8_130, %c0_131, %c0_132] : memref<9x4x2xf32, #tpu.memory_space<vmem>>, vector<1x4x2xf32>
    %192 = vector.shape_cast %191 : vector<1x4x2xf32> to vector<4x2xf32>
    %cst_133 = arith.constant dense<0.000000e+00> : vector<4x256xf32>
    %193 = tpu.matmul %192, %190, %cst_133 {dimension_numbers = #tpu.dot_dimension_numbers<[1], [0], [0], [1], [0, 0, 1, 1], [], []>} : vector<4x2xf32>, vector<2x256xf32>, vector<4x256xf32> -> vector<4x256xf32>
    %194 = arith.addf %185, %193 : vector<4x256xf32>
    %c0_134 = arith.constant 0 : index
    %c0_135 = arith.constant 0 : index
    %195 = vector.load %arg6[%c0_134, %c0_135] : memref<4x1xf32, #tpu.memory_space<vmem>>, vector<4x1xf32>
    %196 = vector.broadcast %195 : vector<4x1xf32> to vector<4x256xf32>
    %197 = arith.mulf %194, %196 : vector<4x256xf32>
    %c0_136 = arith.constant 0 : index
    %c0_137 = arith.constant 0 : index
    %198 = vector.load %arg7[%c0_136, %c0_137] : memref<4x1xf32, #tpu.memory_space<vmem>>, vector<4x1xf32>
    %199 = vector.broadcast %198 : vector<4x1xf32> to vector<4x256xf32>
    %200 = arith.addf %197, %199 : vector<4x256xf32>
    %201 = arith.negf %200 : vector<4x256xf32>
    %202 = math.exp %201 : vector<4x256xf32>
    %cst_138 = arith.constant 1.000000e+00 : f32
    %203 = vector.broadcast %cst_138 : f32 to vector<4x256xf32>
    %204 = arith.addf %203, %202 : vector<4x256xf32>
    %205 = arith.divf %203, %204 : vector<4x256xf32>
    %206 = arith.mulf %200, %205 : vector<4x256xf32>
    %c0_139 = arith.constant 0 : index
    %c0_140 = arith.constant 0 : index
    %c0_141 = arith.constant 0 : index
    %207 = vector.load %arg1[%c0_139, %c0_140, %c0_141] : memref<1x4x256xf32, #tpu.memory_space<vmem>>, vector<1x4x256xf32>
    %208 = vector.shape_cast %207 : vector<1x4x256xf32> to vector<4x256xf32>
    %209 = arith.addf %206, %208 : vector<4x256xf32>
    %c0_142 = arith.constant 0 : index
    %c0_143 = arith.constant 0 : index
    %c0_144 = arith.constant 0 : index
    %210 = vector.load %arg8[%c0_142, %c0_143, %c0_144] : memref<1x4x256xf32, #tpu.memory_space<vmem>>, vector<1x4x256xf32>
    %211 = vector.shape_cast %210 : vector<1x4x256xf32> to vector<4x256xf32>
    %212 = vector.shape_cast %209 : vector<4x256xf32> to vector<1x4x256xf32>
    tpu.vector_store %arg8[%c0_142, %c0_143, %c0_144], %212 {strides = array<i32>} : memref<1x4x256xf32, #tpu.memory_space<vmem>>, vector<1x4x256xf32>,
    return
  }
  func.func @transform_0(%arg0: i32) -> (i32, i32, i32) {
    %c0_i32 = arith.constant 0 : i32
    %c0_i32_0 = arith.constant 0 : i32
    %c0_i32_1 = arith.constant 0 : i32
    return %arg0, %c0_i32, %c0_i32_0 : i32, i32, i32
  }
  func.func @transform_1(%arg0: i32) -> (i32, i32, i32) {
    %c0_i32 = arith.constant 0 : i32
    %c0_i32_0 = arith.constant 0 : i32
    %c0_i32_1 = arith.constant 0 : i32
    %c0_i32_2 = arith.constant 0 : i32
    return %c0_i32, %c0_i32_0, %c0_i32_1 : i32, i32, i32
  }
  func.func @transform_2(%arg0: i32) -> (i32, i32) {
    %c0_i32 = arith.constant 0 : i32
    %c0_i32_0 = arith.constant 0 : i32
    %c0_i32_1 = arith.constant 0 : i32
    return %c0_i32, %c0_i32_0 : i32, i32
  }
  func.func @transform_3(%arg0: i32) -> (i32, i32) {
    %c0_i32 = arith.constant 0 : i32
    %c0_i32_0 = arith.constant 0 : i32
    %c0_i32_1 = arith.constant 0 : i32
    return %c0_i32, %c0_i32_0 : i32, i32
  }
  func.func @transform_4(%arg0: i32) -> (i32, i32, i32) {
    %c0_i32 = arith.constant 0 : i32
    %c0_i32_0 = arith.constant 0 : i32
    %c0_i32_1 = arith.constant 0 : i32
    %c0_i32_2 = arith.constant 0 : i32
    return %c0_i32, %c0_i32_0, %c0_i32_1 : i32, i32, i32
  }
  func.func @transform_5(%arg0: i32) -> (i32, i32) {
    %c0_i32 = arith.constant 0 : i32
    %c0_i32_0 = arith.constant 0 : i32
    %c0_i32_1 = arith.constant 0 : i32
    return %c0_i32, %c0_i32_0 : i32, i32
  }
  func.func @transform_6(%arg0: i32) -> (i32, i32) {
    %c0_i32 = arith.constant 0 : i32
    %c0_i32_0 = arith.constant 0 : i32
    %c0_i32_1 = arith.constant 0 : i32
    return %c0_i32, %c0_i32_0 : i32, i32
  }
  func.func @transform_7(%arg0: i32) -> (i32, i32, i32) {
    %c0_i32 = arith.constant 0 : i32
    %c0_i32_0 = arith.constant 0 : i32
    %c0_i32_1 = arith.constant 0 : i32
    return %arg0, %c0_i32, %c0_i32_0 : i32, i32, i32
  }
}

</mosaic_0001>

<llo_original>
// kernel: tpu_custom_call.1
$region0: #{tpu_custom_call.1}
  #allocation0 [shape = 'u32[]', space=smem, size = 0x4, offset = 0x4, fixed_abs, tag = 'smem constant byte address 0x4 - core index']
  #allocation1 [shape = 'u32[144,128]{1,0:T(1,128)}', space=vmem, size = 0x12000, scoped, tag = 'internal scratch']
  #allocation2 [shape = 'f32[4,512]{1,0:T(4,128)}', space=vmem, size = 0x2000, scoped, tag = 'scratch operand']
  #allocation3 [shape = 'f32[2,512]{1,0:T(2,128)}', space=vmem, size = 0x1000, scoped, tag = 'scratch operand']
  %s0 = inlined_call_operand.vmem [shape: f32[2,4,256], index: 0, kind: input, shape index: {}]
  %s1 = inlined_call_operand.vmem [shape: f32[9,2,4], index: 1, kind: input, shape index: {}]
  %s2 = inlined_call_operand.vmem [shape: f32[2,1], index: 2, kind: input, shape index: {}]
  %s3 = inlined_call_operand.vmem [shape: f32[2,1], index: 3, kind: input, shape index: {}]
  %s4 = inlined_call_operand.vmem [shape: f32[9,4,2], index: 4, kind: input, shape index: {}]
  %s5 = inlined_call_operand.vmem [shape: f32[4,1], index: 5, kind: input, shape index: {}]
  %s6 = inlined_call_operand.vmem [shape: f32[4,1], index: 6, kind: input, shape index: {}]
  %s7 = inlined_call_operand.hbm [shape: f32[2,4,256], index: 7, kind: output, shape index: {}]
  %s8 = sld [smem:[#allocation0]]
  $region61: #{tpu_custom_call.1} parent=0
    _
  %s10 = ssub.s32 1, %s8
  %s11 = scalar_select 0, %s10, %s8
  $region1: #{tpu_custom_call.1} parent=0
    #allocation4 [shape = 'u8[8192]{0}', space=vmem, size = 0x2000, scoped, tag = 'output window, operand 0']
    #allocation5 [shape = 's32[2]{0}', space=sflag, size = 0x8, scoped, tag = 'scoped memory for tpu_custom_call.1']
    %12 = vsyncpa [#allocation5], 0
    %s13 = scalar_lea.sflag [#allocation5], 1
    %14 = vsyncpa %s13, 0
    loop: start=0, step=1, limit=4
    $region2: #{tpu_custom_call.1} parent=1 // loop_pre_header
      _
    $region3: #{tpu_custom_call.1} parent=1 // loop_header
      %s16 = sphi 0, %s20
      %p17 = scmp.ge.s32.totalorder %s16, 4
      %s26 = sphi 0, %s28
      %s29 = sphi 0, %s26
      %s30 = sphi 0, %s29
      %s46 = sphi 0, %s30
      %s50 = sphi 0, %s50
      %s52 = sphi 0, %s50
      %s53 = sphi 0, %s52
      %s67 = sphi 0, %s53
      %s71 = sphi 0, %s71
      %s73 = sphi 0, %s71
      %s74 = sphi 0, %s73
      %s88 = sphi 0, %s74
      %s92 = sphi 0, %s92
      %s94 = sphi 0, %s92
      %s95 = sphi 0, %s94
      %s109 = sphi 0, %s95
      %s113 = sphi 0, %s113
      %s115 = sphi 0, %s113
      %s116 = sphi 0, %s115
      %s130 = sphi 0, %s116
      %s134 = sphi 0, %s134
      %s136 = sphi 0, %s134
      %s137 = sphi 0, %s136
      %s151 = sphi 0, %s137
      %s155 = sphi 0, %s155
      %s157 = sphi 0, %s155
      %s158 = sphi 0, %s157
      %s172 = sphi 0, %s158
      %s178 = sphi 0, %s180
      %s181 = sphi 0, %s178
      %s182 = sphi 0, %s181
      %s198 = sphi 0, %s182
    $region4: #{tpu_custom_call.1} parent=1 // loop_header_branch
      %19 = sbr.rel (%p17) target = $region8
    $region5: #{tpu_custom_call.1} parent=1 // loop_body
      %s21 = ssub.s32 %s16, 1
      %s22 = ssub.s32 %s16, 2
      %s23 = sadd.s32 %s16, 1
      %s24 = ssub.s32 %s16, %s23
      %p25 = scmp.eq.s32.totalorder %s24, 0
      %s27 = sadd.s32 %s26, 1
      %s28 = scalar_select %p25, %s26, %s27
      %p31 = pneg %p25
      %p32 = scmp.eq.s32.totalorder %s16, 1
      %p33 = por %p31, %p32
      %p34 = scmp.ne.s32.totalorder %s26, %s29
      %p35 = scmp.eq.s32.totalorder %s16, 0
      %p36 = por %p34, %p35
      %p37 = scmp.ne.s32.totalorder %s26, %s29
      %p38 = scmp.eq.s32.totalorder %s21, 1
      %p39 = por %p37, %p38
      %p40 = scmp.ne.s32.totalorder %s29, %s30
      %p41 = scmp.eq.s32.totalorder %s21, 0
      %p42 = por %p40, %p41
      %p43 = scmp.ne.s32.totalorder %s29, %s30
      %p44 = scmp.eq.s32.totalorder %s22, 1
      %p45 = por %p43, %p44
      %p47 = scmp.ne.s32.totalorder %s30, %s46
      %p48 = scmp.eq.s32.totalorder %s22, 0
      %p49 = por %p47, %p48
      %s51 = sadd.s32 %s50, 1
      %p54 = scmp.eq.s32.totalorder %s16, 1
      %p55 = scmp.ne.s32.totalorder %s50, %s52
      %p56 = scmp.eq.s32.totalorder %s16, 0
      %p57 = por %p55, %p56
      %p58 = scmp.ne.s32.totalorder %s50, %s52
      %p59 = scmp.eq.s32.totalorder %s21, 1
      %p60 = por %p58, %p59
      %p61 = scmp.ne.s32.totalorder %s52, %s53
      %p62 = scmp.eq.s32.totalorder %s21, 0
      %p63 = por %p61, %p62
      %p64 = scmp.ne.s32.totalorder %s52, %s53
      %p65 = scmp.eq.s32.totalorder %s22, 1
      %p66 = por %p64, %p65
      %p68 = scmp.ne.s32.totalorder %s53, %s67
      %p69 = scmp.eq.s32.totalorder %s22, 0
      %p70 = por %p68, %p69
      %s72 = sadd.s32 %s71, 1
      %p75 = scmp.eq.s32.totalorder %s16, 1
      %p76 = scmp.ne.s32.totalorder %s71, %s73
      %p77 = scmp.eq.s32.totalorder %s16, 0
      %p78 = por %p76, %p77
      %p79 = scmp.ne.s32.totalorder %s71, %s73
      %p80 = scmp.eq.s32.totalorder %s21, 1
      %p81 = por %p79, %p80
      %p82 = scmp.ne.s32.totalorder %s73, %s74
      %p83 = scmp.eq.s32.totalorder %s21, 0
      %p84 = por %p82, %p83
      %p85 = scmp.ne.s32.totalorder %s73, %s74
      %p86 = scmp.eq.s32.totalorder %s22, 1
      %p87 = por %p85, %p86
      %p89 = scmp.ne.s32.totalorder %s74, %s88
      %p90 = scmp.eq.s32.totalorder %s22, 0
      %p91 = por %p89, %p90
      %s93 = sadd.s32 %s92, 1
      %p96 = scmp.eq.s32.totalorder %s16, 1
      %p97 = scmp.ne.s32.totalorder %s92, %s94
      %p98 = scmp.eq.s32.totalorder %s16, 0
      %p99 = por %p97, %p98
      %p100 = scmp.ne.s32.totalorder %s92, %s94
      %p101 = scmp.eq.s32.totalorder %s21, 1
      %p102 = por %p100, %p101
      %p103 = scmp.ne.s32.totalorder %s94, %s95
      %p104 = scmp.eq.s32.totalorder %s21, 0
      %p105 = por %p103, %p104
      %p106 = scmp.ne.s32.totalorder %s94, %s95
      %p107 = scmp.eq.s32.totalorder %s22, 1
      %p108 = por %p106, %p107
      %p110 = scmp.ne.s32.totalorder %s95, %s109
      %p111 = scmp.eq.s32.totalorder %s22, 0
      %p112 = por %p110, %p111
      %s114 = sadd.s32 %s113, 1
      %p117 = scmp.eq.s32.totalorder %s16, 1
      %p118 = scmp.ne.s32.totalorder %s113, %s115
      %p119 = scmp.eq.s32.totalorder %s16, 0
      %p120 = por %p118, %p119
      %p121 = scmp.ne.s32.totalorder %s113, %s115
      %p122 = scmp.eq.s32.totalorder %s21, 1
      %p123 = por %p121, %p122
      %p124 = scmp.ne.s32.totalorder %s115, %s116
      %p125 = scmp.eq.s32.totalorder %s21, 0
      %p126 = por %p124, %p125
      %p127 = scmp.ne.s32.totalorder %s115, %s116
      %p128 = scmp.eq.s32.totalorder %s22, 1
      %p129 = por %p127, %p128
      %p131 = scmp.ne.s32.totalorder %s116, %s130
      %p132 = scmp.eq.s32.totalorder %s22, 0
      %p133 = por %p131, %p132
      %s135 = sadd.s32 %s134, 1
      %p138 = scmp.eq.s32.totalorder %s16, 1
      %p139 = scmp.ne.s32.totalorder %s134, %s136
      %p140 = scmp.eq.s32.totalorder %s16, 0
      %p141 = por %p139, %p140
      %p142 = scmp.ne.s32.totalorder %s134, %s136
      %p143 = scmp.eq.s32.totalorder %s21, 1
      %p144 = por %p142, %p143
      %p145 = scmp.ne.s32.totalorder %s136, %s137
      %p146 = scmp.eq.s32.totalorder %s21, 0
      %p147 = por %p145, %p146
      %p148 = scmp.ne.s32.totalorder %s136, %s137
      %p149 = scmp.eq.s32.totalorder %s22, 1
      %p150 = por %p148, %p149
      %p152 = scmp.ne.s32.totalorder %s137, %s151
      %p153 = scmp.eq.s32.totalorder %s22, 0
      %p154 = por %p152, %p153
      %s156 = sadd.s32 %s155, 1
      %p159 = scmp.eq.s32.totalorder %s16, 1
      %p160 = scmp.ne.s32.totalorder %s155, %s157
      %p161 = scmp.eq.s32.totalorder %s16, 0
      %p162 = por %p160, %p161
      %p163 = scmp.ne.s32.totalorder %s155, %s157
      %p164 = scmp.eq.s32.totalorder %s21, 1
      %p165 = por %p163, %p164
      %p166 = scmp.ne.s32.totalorder %s157, %s158
      %p167 = scmp.eq.s32.totalorder %s21, 0
      %p168 = por %p166, %p167
      %p169 = scmp.ne.s32.totalorder %s157, %s158
      %p170 = scmp.eq.s32.totalorder %s22, 1
      %p171 = por %p169, %p170
      %p173 = scmp.ne.s32.totalorder %s158, %s172
      %p174 = scmp.eq.s32.totalorder %s22, 0
      %p175 = por %p173, %p174
      %s176 = ssub.s32 %s16, %s23
      %p177 = scmp.eq.s32.totalorder %s176, 0
      %s179 = sadd.s32 %s178, 1
      %s180 = scalar_select %p177, %s178, %s179
      %p183 = pneg %p177
      %p184 = scmp.eq.s32.totalorder %s16, 1
      %p185 = por %p183, %p184
      %p186 = scmp.ne.s32.totalorder %s178, %s181
      %p187 = scmp.eq.s32.totalorder %s16, 0
      %p188 = por %p186, %p187
      %p189 = scmp.ne.s32.totalorder %s178, %s181
      %p190 = scmp.eq.s32.totalorder %s21, 1
      %p191 = por %p189, %p190
      %p192 = scmp.ne.s32.totalorder %s181, %s182
      %p193 = scmp.eq.s32.totalorder %s21, 0
      %p194 = por %p192, %p193
      %p195 = scmp.ne.s32.totalorder %s181, %s182
      %p196 = scmp.eq.s32.totalorder %s22, 1
      %p197 = por %p195, %p196
      %p199 = scmp.ne.s32.totalorder %s182, %s198
      %p200 = scmp.eq.s32.totalorder %s22, 0
      %p201 = por %p199, %p200
      %p202 = scmp.le.s32.totalorder 1, %s16
      %p203 = scmp.lt.s32.totalorder %s16, 3
      %p204 = pnand %p202, %p203
      %p205 = pneg %p204
      // Predicated region
      $region9: #{tpu_custom_call.1} parent=5 // pred_check
        _
      $region10: #{tpu_custom_call.1} parent=5 // pred_check_branch
        %207 = sbr.rel (%p204) target = $region12
      $region11: #{tpu_custom_call.1} parent=5 // pred_region
        %s208 = ssub.s32 %s16, 1
        // Predicated region
        $region13: #{tpu_custom_call.1} parent=11 // pred_check
          %p209 = pneg %p63
        $region14: #{tpu_custom_call.1} parent=11 // pred_check_branch
          %211 = sbr.rel (%p209) target = $region16
        $region15: #{tpu_custom_call.1} parent=11 // pred_region
          _
        $region16: #{tpu_custom_call.1} parent=11 // pred_fallthru
          _
        // Predicated region
        $region17: #{tpu_custom_call.1} parent=11 // pred_check
          %p212 = pneg %p84
        $region18: #{tpu_custom_call.1} parent=11 // pred_check_branch
          %214 = sbr.rel (%p212) target = $region20
        $region19: #{tpu_custom_call.1} parent=11 // pred_region
          _
        $region20: #{tpu_custom_call.1} parent=11 // pred_fallthru
          _
        // Predicated region
        $region21: #{tpu_custom_call.1} parent=11 // pred_check
          %p215 = pneg %p105
        $region22: #{tpu_custom_call.1} parent=11 // pred_check_branch
          %217 = sbr.rel (%p215) target = $region24
        $region23: #{tpu_custom_call.1} parent=11 // pred_region
          _
        $region24: #{tpu_custom_call.1} parent=11 // pred_fallthru
          _
        // Predicated region
        $region25: #{tpu_custom_call.1} parent=11 // pred_check
          %p218 = pneg %p126
        $region26: #{tpu_custom_call.1} parent=11 // pred_check_branch
          %220 = sbr.rel (%p218) target = $region28
        $region27: #{tpu_custom_call.1} parent=11 // pred_region
          _
        $region28: #{tpu_custom_call.1} parent=11 // pred_fallthru
          _
        // Predicated region
        $region29: #{tpu_custom_call.1} parent=11 // pred_check
          %p221 = pneg %p147
        $region30: #{tpu_custom_call.1} parent=11 // pred_check_branch
          %223 = sbr.rel (%p221) target = $region32
        $region31: #{tpu_custom_call.1} parent=11 // pred_region
          _
        $region32: #{tpu_custom_call.1} parent=11 // pred_fallthru
          _
        // Predicated region
        $region33: #{tpu_custom_call.1} parent=11 // pred_check
          %p224 = pneg %p168
        $region34: #{tpu_custom_call.1} parent=11 // pred_check_branch
          %226 = sbr.rel (%p224) target = $region36
        $region35: #{tpu_custom_call.1} parent=11 // pred_region
          _
        $region36: #{tpu_custom_call.1} parent=11 // pred_fallthru
          _
      $region12: #{tpu_custom_call.1} parent=5 // pred_fallthru
        _
      %p227 = scmp.lt.s32.totalorder %s16, 2
      // Predicated region
      $region37: #{tpu_custom_call.1} parent=5 // pred_check
        %p228 = pneg %p227
      $region38: #{tpu_custom_call.1} parent=5 // pred_check_branch
        %230 = sbr.rel (%p228) target = $region40
      $region39: #{tpu_custom_call.1} parent=5 // pred_region
        // Predicated region
        $region41: #{tpu_custom_call.1} parent=39 // pred_check
          %p231 = pneg %p36
        $region42: #{tpu_custom_call.1} parent=39 // pred_check_branch
          %233 = sbr.rel (%p231) target = $region44
        $region43: #{tpu_custom_call.1} parent=39 // pred_region
          %p234 = scmp.lt.s32.totalorder %s16, 1
          %s235 = scalar_select %p234, %s16, 1
          %s236 = smul.addr %s235, 2
          %s237 = smul.addr %s236, 4
          %s238 = scalar_lea.vmem %s0, %s237
        $region44: #{tpu_custom_call.1} parent=39 // pred_fallthru
          _
      $region40: #{tpu_custom_call.1} parent=5 // pred_fallthru
        _
      %p239 = scmp.le.s32.totalorder 1, %s16
      %p240 = scmp.lt.s32.totalorder %s16, 3
      %p241 = pnand %p239, %p240
      %p242 = pneg %p241
      // Predicated region
      $region45: #{tpu_custom_call.1} parent=5 // pred_check
        _
      $region46: #{tpu_custom_call.1} parent=5 // pred_check_branch
        %244 = sbr.rel (%p241) target = $region48
      $region47: #{tpu_custom_call.1} parent=5 // pred_region
        %s245 = ssub.s32 %s16, 1
        %p246 = scmp.lt.s32.totalorder %s21, 1
        %s247 = scalar_select %p246, %s21, 1
        %s248 = smul.addr %s247, 2
        %s249 = smul.addr %s248, 4
        %s250 = scalar_lea.vmem %s0, %s249
        %p251 = pneg %p42
        %p252 = pneg %p39
        %p253 = pneg %p63
        %p254 = pneg %p60
        %p255 = pneg %p84
        %p256 = pneg %p81
        %p257 = pneg %p105
        %p258 = pneg %p102
        %p259 = pneg %p126
        %p260 = pneg %p123
        %p261 = pneg %p147
        %p262 = pneg %p144
        %p263 = pneg %p168
        %p264 = pneg %p165
        %p265 = pneg %p194
        %p266 = pneg %p191
        %s267 = sand.u32 %s181, 1
        %s268 = scalar_lea.sflag [#allocation5], %s267
        %s269 = sand.u32 %s181, 1
        %s270 = smul.addr %s269, 8
        %s271 = scalar_lea.vmem [#allocation4], %s270
        %p272 = scmp.lt.s32.totalorder %s21, 1
        %s273 = scalar_select %p272, %s21, 1
        %s274 = smul.addr %s273, 2
        %s275 = smul.addr %s274, 4
        %s276 = scalar_lea.vmem %s0, %s275
        %v277 = vlaneseq
        %v278 = vand.u32 %v277, 127
        %v279 = vadd.s32 %v278, 128
        %vm280 = vcmp.lt.s32.totalorder %v278, 0
        %v281 = vsub.s32 0, %v278
        %v282 = vsel %vm280, %v281, %v278
        %v283 = vshrl.u32 %v282, 4
        %v284 = vand.u32 %v282, 15
        %v285 = vsub.s32 0, %v284
        %v286 = vsel %vm280, %v285, %v284
        %vm287 = vcmp.lt.s32.totalorder %v279, 0
        %v288 = vsub.s32 0, %v279
        %v289 = vsel %vm287, %v288, %v279
        %v290 = vshrl.u32 %v289, 4
        %v291 = vand.u32 %v289, 15
        %v292 = vsub.s32 0, %v291
        %v293 = vsel %vm287, %v292, %v291
        %vm294 = vcmp.ne.s32.totalorder %v286, 0
        %vm295 = vcmp.ne.s32.totalorder %v293, 0
        %vm296 = vcmp.lt.s32.totalorder %v286, 0
        %vm297 = vcmp.lt.s32.totalorder %v293, 0
        %vm298 = vmand %vm296, %vm294
        %vm299 = vmand %vm297, %vm295
        %v300 = vadd.s32 %v286, 16
        %v301 = vadd.s32 %v293, 16
        %v302 = vsel %vm298, %v300, %v286
        %v303 = vsel %vm299, %v301, %v293
        %v304 = vadd.s32 %v302, 4294967295
        %v305 = vadd.s32 %v303, 4294967295
        %vm306 = vcmp.ge.s32.totalorder %v304, 0
        %vm307 = vcmp.ge.s32.totalorder %v305, 0
        %vm308 = vcmp.lt.s32.totalorder %v304, 16
        %vm309 = vcmp.lt.s32.totalorder %v305, 16
        %vm310 = vmand %vm306, %vm308
        %vm311 = vmand %vm307, %vm309
        %v312 = vadd.s32 %v302, 1
        %v313 = vadd.s32 %v303, 1
        %vm314 = vcmp.ge.s32.totalorder %v312, 0
        %vm315 = vcmp.ge.s32.totalorder %v313, 0
        %vm316 = vcmp.lt.s32.totalorder %v312, 16
        %vm317 = vcmp.lt.s32.totalorder %v313, 16
        %vm318 = vmand %vm314, %vm316
        %vm319 = vmand %vm315, %vm317
        %320 = vst [vmem:[#allocation2] sm:$0xf] 0.0
        %321 = vst [vmem:[#allocation2 + $0xc] sm:$0xf] 0.0
        %322 = vst [vmem:[#allocation3] sm:$0x3] 0.0
        %323 = vst [vmem:[#allocation3 + $0x6] sm:$0x3] 0.0
        %v324 = vld [vmem:[%s276] sm:$0xff]
        %325 = vst [vmem:[#allocation2 + $0x4] sm:$0xff] %v324
        %v326 = vld [vmem:[#allocation2] sm:$0xff]
        %v327 = vld [vmem:[#allocation2 + $0x8] sm:$0xf]
        %v328 = vsel %vm310, 1, 0
        %v329 = vsel %vm311, 1, 0
        %vm330 = vcmp.eq.s32.totalorder %v328, 1
        %vm331 = vcmp.eq.s32.totalorder %v329, 1
        %v334 = vcombine.high %v326, %v326
        %335 = vrot.lane.b32.xlu0 %v326, 17
        %v336 = vpop.permute.xlu0 %335
        %337 = vrot.lane.b32.xlu0 %v334, 17
        %v338 = vpop.permute.xlu0 %337
        %339 = vrot.lane.b32.xlu0 %v327, 17
        %v340 = vpop.permute.xlu0 %339
        %vm341 = vcmask 138240
        %v342 = vsel %vm341, %v336, %v338
        %v343 = vsel %vm341, %v338, %v340
        %v346 = vsel %vm330, %v342, 0.0
        %v347 = vsel %vm331, %v343, 0.0
        %v348 = vld [vmem:[%s1] sm:$0x3]
        %s349 = scalar_lea.vmem %s1, 2
        %v350 = vld [vmem:[%s349] sm:$0x3]
        %351 = vrot.lane.b32.xlu0 %v326, 16
        %v352 = vpop.permute.xlu0 %351
        %353 = vrot.lane.b32.xlu0 %v334, 16
        %v354 = vpop.permute.xlu0 %353
        %355 = vrot.lane.b32.xlu0 %v327, 16
        %v356 = vpop.permute.xlu0 %355
        %vm357 = vcmask 130048
        %v358 = vsel %vm357, %v352, %v354
        %v359 = vsel %vm357, %v354, %v356
        %vm360 = vcmask 31744
        %v362 = vsel %vm360, %v350, 0
        %vm364 = vcmask 1043456
        %v365 = vsel %vm364, %v358, 0
        %v367 = vsel %vm364, %v359, 0
        %369 = vmatprep.subr.mxu0 %v367
        %370 = vmatpush1.msra.mxu0 %v365
        %371 = vmatprep.subr.mxu0 0.0
        %372 = vmatpush1.msra.mxu0 0.0
        %373 = vmatprep.subr.mxu0 0.0
        %374 = vmatpush1.msra.mxu0 0.0
        %375 = vmatprep.subr.mxu0 0.0
        %376 = vmatpush1.msra.mxu0 0.0
        %377 = vmatprep.subr.mxu0 0.0
        %378 = vmatpush1.msra.mxu0 0.0
        %379 = vmatprep.subr.mxu0 0.0
        %380 = vmatpush1.msra.mxu0 0.0
        %381 = vmatprep.subr.mxu0 0.0
        %382 = vmatpush1.msra.mxu0 0.0
        %383 = vmatprep.subr.mxu0 0.0
        %384 = vmatpush1.msra.mxu0 0.0
        %385 = vmatprep.subr.mxu0 0.0
        %386 = vmatpush1.msra.mxu0 0.0
        %387 = vmatprep.subr.mxu0 0.0
        %388 = vmatpush1.msra.mxu0 0.0
        %389 = vmatprep.subr.mxu0 0.0
        %390 = vmatpush1.msra.mxu0 0.0
        %391 = vmatprep.subr.mxu0 0.0
        %392 = vmatpush1.msra.mxu0 0.0
        %393 = vmatprep.subr.mxu0 0.0
        %394 = vmatpush1.msra.mxu0 0.0
        %395 = vmatprep.subr.mxu0 0.0
        %396 = vmatpush1.msra.mxu0 0.0
        %397 = vmatprep.subr.mxu0 0.0
        %398 = vmatpush1.msra.mxu0 0.0
        %399 = vmatprep.subr.mxu0 0.0
        %400 = vmatpush1.msra.mxu0 0.0
        %401 = vmatprep.subr.mxu0 0.0
        %402 = vmatpush1.msra.mxu0 0.0
        %403 = vmatprep.subr.mxu0 0.0
        %404 = vmatpush1.msra.mxu0 0.0
        %405 = vmatprep.subr.mxu0 0.0
        %406 = vmatpush1.msra.mxu0 0.0
        %407 = vmatprep.subr.mxu0 0.0
        %408 = vmatpush1.msra.mxu0 0.0
        %409 = vmatprep.subr.mxu0 0.0
        %410 = vmatpush1.msra.mxu0 0.0
        %411 = vmatprep.subr.mxu0 0.0
        %412 = vmatpush1.msra.mxu0 0.0
        %413 = vmatprep.subr.mxu0 0.0
        %414 = vmatpush1.msra.mxu0 0.0
        %415 = vmatprep.subr.mxu0 0.0
        %416 = vmatpush1.msra.mxu0 0.0
        %417 = vmatprep.subr.mxu0 0.0
        %418 = vmatpush1.msra.mxu0 0.0
        %419 = vmatprep.subr.mxu0 0.0
        %420 = vmatpush1.msra.mxu0 0.0
        %421 = vmatprep.subr.mxu0 0.0
        %422 = vmatpush1.msra.mxu0 0.0
        %423 = vmatprep.subr.mxu0 0.0
        %424 = vmatpush1.msra.mxu0 0.0
        %425 = vmatprep.subr.mxu0 0.0
        %426 = vmatpush1.msra.mxu0 0.0
        %427 = vmatprep.subr.mxu0 0.0
        %428 = vmatpush1.msra.mxu0 0.0
        %429 = vmatprep.subr.mxu0 0.0
        %430 = vmatpush1.msra.mxu0 0.0
        %431 = vmatprep.subr.mxu0 0.0
        %432 = vmatpush1.msra.mxu0 0.0
        %433 = vmatprep.mubr.f32.mxu0 0.0
        %434 = vmatmul.mubr.f32.gmra.mrb[0].mxu0 %v362
        %v435 = vpop.f32.mrb[0].mxu0
        %v436 = vadd.f32 0.0, %v435
        %v437 = vpop.f32.mrb[0].mxu0
        %v438 = vadd.f32 0.0, %v437
        %439 = vdwg.mxu0
        %v441 = vsel %vm360, %v348, 0
        %v444 = vsel %vm364, %v346, 0
        %v447 = vsel %vm364, %v347, 0
        %449 = vmatprep.subr.mxu0 %v447
        %450 = vmatpush1.msra.mxu0 %v444
        %451 = vmatprep.subr.mxu0 0.0
        %452 = vmatpush1.msra.mxu0 0.0
        %453 = vmatprep.subr.mxu0 0.0
        %454 = vmatpush1.msra.mxu0 0.0
        %455 = vmatprep.subr.mxu0 0.0
        %456 = vmatpush1.msra.mxu0 0.0
        %457 = vmatprep.subr.mxu0 0.0
        %458 = vmatpush1.msra.mxu0 0.0
        %459 = vmatprep.subr.mxu0 0.0
        %460 = vmatpush1.msra.mxu0 0.0
        %461 = vmatprep.subr.mxu0 0.0
        %462 = vmatpush1.msra.mxu0 0.0
        %463 = vmatprep.subr.mxu0 0.0
        %464 = vmatpush1.msra.mxu0 0.0
        %465 = vmatprep.subr.mxu0 0.0
        %466 = vmatpush1.msra.mxu0 0.0
        %467 = vmatprep.subr.mxu0 0.0
        %468 = vmatpush1.msra.mxu0 0.0
        %469 = vmatprep.subr.mxu0 0.0
        %470 = vmatpush1.msra.mxu0 0.0
        %471 = vmatprep.subr.mxu0 0.0
        %472 = vmatpush1.msra.mxu0 0.0
        %473 = vmatprep.subr.mxu0 0.0
        %474 = vmatpush1.msra.mxu0 0.0
        %475 = vmatprep.subr.mxu0 0.0
        %476 = vmatpush1.msra.mxu0 0.0
        %477 = vmatprep.subr.mxu0 0.0
        %478 = vmatpush1.msra.mxu0 0.0
        %479 = vmatprep.subr.mxu0 0.0
        %480 = vmatpush1.msra.mxu0 0.0
        %481 = vmatprep.subr.mxu0 0.0
        %482 = vmatpush1.msra.mxu0 0.0
        %483 = vmatprep.subr.mxu0 0.0
        %484 = vmatpush1.msra.mxu0 0.0
        %485 = vmatprep.subr.mxu0 0.0
        %486 = vmatpush1.msra.mxu0 0.0
        %487 = vmatprep.subr.mxu0 0.0
        %488 = vmatpush1.msra.mxu0 0.0
        %489 = vmatprep.subr.mxu0 0.0
        %490 = vmatpush1.msra.mxu0 0.0
        %491 = vmatprep.subr.mxu0 0.0
        %492 = vmatpush1.msra.mxu0 0.0
        %493 = vmatprep.subr.mxu0 0.0
        %494 = vmatpush1.msra.mxu0 0.0
        %495 = vmatprep.subr.mxu0 0.0
        %496 = vmatpush1.msra.mxu0 0.0
        %497 = vmatprep.subr.mxu0 0.0
        %498 = vmatpush1.msra.mxu0 0.0
        %499 = vmatprep.subr.mxu0 0.0
        %500 = vmatpush1.msra.mxu0 0.0
        %501 = vmatprep.subr.mxu0 0.0
        %502 = vmatpush1.msra.mxu0 0.0
        %503 = vmatprep.subr.mxu0 0.0
        %504 = vmatpush1.msra.mxu0 0.0
        %505 = vmatprep.subr.mxu0 0.0
        %506 = vmatpush1.msra.mxu0 0.0
        %507 = vmatprep.subr.mxu0 0.0
        %508 = vmatpush1.msra.mxu0 0.0
        %509 = vmatprep.subr.mxu0 0.0
        %510 = vmatpush1.msra.mxu0 0.0
        %511 = vmatprep.subr.mxu0 0.0
        %512 = vmatpush1.msra.mxu0 0.0
        %513 = vmatprep.mubr.f32.mxu0 0.0
        %514 = vmatmul.mubr.f32.gmra.mrb[0].mxu0 %v441
        %v515 = vpop.f32.mrb[0].mxu0
        %v516 = vadd.f32 %v436, %v515
        %v517 = vpop.f32.mrb[0].mxu0
        %v518 = vadd.f32 %v438, %v517
        %519 = vdwg.mxu0
        %v520 = vld [vmem:[#allocation2] sm:$0xff]
        %v521 = vld [vmem:[#allocation2 + $0x8] sm:$0xf]
        %v522 = vsel %vm318, 1, 0
        %v523 = vsel %vm319, 1, 0
        %vm524 = vcmp.eq.s32.totalorder %v522, 1
        %vm525 = vcmp.eq.s32.totalorder %v523, 1
        %v528 = vcombine.high %v520, %v520
        %529 = vrot.lane.b32.xlu0 %v520, 15
        %v530 = vpop.permute.xlu0 %529
        %531 = vrot.lane.b32.xlu0 %v528, 15
        %v532 = vpop.permute.xlu0 %531
        %533 = vrot.lane.b32.xlu0 %v521, 15
        %v534 = vpop.permute.xlu0 %533
        %vm535 = vcmask 121856
        %v536 = vsel %vm535, %v530, %v532
        %v537 = vsel %vm535, %v532, %v534
        %v540 = vsel %vm524, %v536, 0.0
        %v541 = vsel %vm525, %v537, 0.0
        %s542 = scalar_lea.vmem %s1, 4
        %v543 = vld [vmem:[%s542] sm:$0x3]
        %v545 = vsel %vm360, %v543, 0
        %v548 = vsel %vm364, %v540, 0
        %v551 = vsel %vm364, %v541, 0
        %553 = vmatprep.subr.mxu0 %v551
        %554 = vmatpush1.msra.mxu0 %v548
        %555 = vmatprep.subr.mxu0 0.0
        %556 = vmatpush1.msra.mxu0 0.0
        %557 = vmatprep.subr.mxu0 0.0
        %558 = vmatpush1.msra.mxu0 0.0
        %559 = vmatprep.subr.mxu0 0.0
        %560 = vmatpush1.msra.mxu0 0.0
        %561 = vmatprep.subr.mxu0 0.0
        %562 = vmatpush1.msra.mxu0 0.0
        %563 = vmatprep.subr.mxu0 0.0
        %564 = vmatpush1.msra.mxu0 0.0
        %565 = vmatprep.subr.mxu0 0.0
        %566 = vmatpush1.msra.mxu0 0.0
        %567 = vmatprep.subr.mxu0 0.0
        %568 = vmatpush1.msra.mxu0 0.0
        %569 = vmatprep.subr.mxu0 0.0
        %570 = vmatpush1.msra.mxu0 0.0
        %571 = vmatprep.subr.mxu0 0.0
        %572 = vmatpush1.msra.mxu0 0.0
        %573 = vmatprep.subr.mxu0 0.0
        %574 = vmatpush1.msra.mxu0 0.0
        %575 = vmatprep.subr.mxu0 0.0
        %576 = vmatpush1.msra.mxu0 0.0
        %577 = vmatprep.subr.mxu0 0.0
        %578 = vmatpush1.msra.mxu0 0.0
        %579 = vmatprep.subr.mxu0 0.0
        %580 = vmatpush1.msra.mxu0 0.0
        %581 = vmatprep.subr.mxu0 0.0
        %582 = vmatpush1.msra.mxu0 0.0
        %583 = vmatprep.subr.mxu0 0.0
        %584 = vmatpush1.msra.mxu0 0.0
        %585 = vmatprep.subr.mxu0 0.0
        %586 = vmatpush1.msra.mxu0 0.0
        %587 = vmatprep.subr.mxu0 0.0
        %588 = vmatpush1.msra.mxu0 0.0
        %589 = vmatprep.subr.mxu0 0.0
        %590 = vmatpush1.msra.mxu0 0.0
        %591 = vmatprep.subr.mxu0 0.0
        %592 = vmatpush1.msra.mxu0 0.0
        %593 = vmatprep.subr.mxu0 0.0
        %594 = vmatpush1.msra.mxu0 0.0
        %595 = vmatprep.subr.mxu0 0.0
        %596 = vmatpush1.msra.mxu0 0.0
        %597 = vmatprep.subr.mxu0 0.0
        %598 = vmatpush1.msra.mxu0 0.0
        %599 = vmatprep.subr.mxu0 0.0
        %600 = vmatpush1.msra.mxu0 0.0
        %601 = vmatprep.subr.mxu0 0.0
        %602 = vmatpush1.msra.mxu0 0.0
        %603 = vmatprep.subr.mxu0 0.0
        %604 = vmatpush1.msra.mxu0 0.0
        %605 = vmatprep.subr.mxu0 0.0
        %606 = vmatpush1.msra.mxu0 0.0
        %607 = vmatprep.subr.mxu0 0.0
        %608 = vmatpush1.msra.mxu0 0.0
        %609 = vmatprep.subr.mxu0 0.0
        %610 = vmatpush1.msra.mxu0 0.0
        %611 = vmatprep.subr.mxu0 0.0
        %612 = vmatpush1.msra.mxu0 0.0
        %613 = vmatprep.subr.mxu0 0.0
        %614 = vmatpush1.msra.mxu0 0.0
        %615 = vmatprep.subr.mxu0 0.0
        %616 = vmatpush1.msra.mxu0 0.0
        %617 = vmatprep.mubr.f32.mxu0 0.0
        %618 = vmatmul.mubr.f32.gmra.mrb[0].mxu0 %v545
        %v619 = vpop.f32.mrb[0].mxu0
        %v620 = vadd.f32 0.0, %v619
        %v621 = vpop.f32.mrb[0].mxu0
        %v622 = vadd.f32 0.0, %v621
        %623 = vdwg.mxu0
        %v624 = vadd.f32 %v516, %v620
        %v625 = vadd.f32 %v518, %v622
        %v626 = vld [vmem:[#allocation2] sm:$0xff]
        %v627 = vld [vmem:[#allocation2 + $0x8] sm:$0xf]
        %v630 = vcombine.high %v626, %v626
        %631 = vrot.lane.b32.xlu0 %v626, 1
        %v632 = vpop.permute.xlu0 %631
        %633 = vrot.lane.b32.xlu0 %v630, 1
        %v634 = vpop.permute.xlu0 %633
        %635 = vrot.lane.b32.xlu0 %v627, 1
        %v636 = vpop.permute.xlu0 %635
        %vm637 = vcmask 7168
        %v638 = vsel %vm637, %v632, %v634
        %v639 = vsel %vm637, %v634, %v636
        %v642 = vsel %vm330, %v638, 0.0
        %v643 = vsel %vm331, %v639, 0.0
        %s644 = scalar_lea.vmem %s1, 6
        %v645 = vld [vmem:[%s644] sm:$0x3]
        %v647 = vsel %vm360, %v645, 0
        %v650 = vsel %vm364, %v642, 0
        %v653 = vsel %vm364, %v643, 0
        %655 = vmatprep.subr.mxu0 %v653
        %656 = vmatpush1.msra.mxu0 %v650
        %657 = vmatprep.subr.mxu0 0.0
        %658 = vmatpush1.msra.mxu0 0.0
        %659 = vmatprep.subr.mxu0 0.0
        %660 = vmatpush1.msra.mxu0 0.0
        %661 = vmatprep.subr.mxu0 0.0
        %662 = vmatpush1.msra.mxu0 0.0
        %663 = vmatprep.subr.mxu0 0.0
        %664 = vmatpush1.msra.mxu0 0.0
        %665 = vmatprep.subr.mxu0 0.0
        %666 = vmatpush1.msra.mxu0 0.0
        %667 = vmatprep.subr.mxu0 0.0
        %668 = vmatpush1.msra.mxu0 0.0
        %669 = vmatprep.subr.mxu0 0.0
        %670 = vmatpush1.msra.mxu0 0.0
        %671 = vmatprep.subr.mxu0 0.0
        %672 = vmatpush1.msra.mxu0 0.0
        %673 = vmatprep.subr.mxu0 0.0
        %674 = vmatpush1.msra.mxu0 0.0
        %675 = vmatprep.subr.mxu0 0.0
        %676 = vmatpush1.msra.mxu0 0.0
        %677 = vmatprep.subr.mxu0 0.0
        %678 = vmatpush1.msra.mxu0 0.0
        %679 = vmatprep.subr.mxu0 0.0
        %680 = vmatpush1.msra.mxu0 0.0
        %681 = vmatprep.subr.mxu0 0.0
        %682 = vmatpush1.msra.mxu0 0.0
        %683 = vmatprep.subr.mxu0 0.0
        %684 = vmatpush1.msra.mxu0 0.0
        %685 = vmatprep.subr.mxu0 0.0
        %686 = vmatpush1.msra.mxu0 0.0
        %687 = vmatprep.subr.mxu0 0.0
        %688 = vmatpush1.msra.mxu0 0.0
        %689 = vmatprep.subr.mxu0 0.0
        %690 = vmatpush1.msra.mxu0 0.0
        %691 = vmatprep.subr.mxu0 0.0
        %692 = vmatpush1.msra.mxu0 0.0
        %693 = vmatprep.subr.mxu0 0.0
        %694 = vmatpush1.msra.mxu0 0.0
        %695 = vmatprep.subr.mxu0 0.0
        %696 = vmatpush1.msra.mxu0 0.0
        %697 = vmatprep.subr.mxu0 0.0
        %698 = vmatpush1.msra.mxu0 0.0
        %699 = vmatprep.subr.mxu0 0.0
        %700 = vmatpush1.msra.mxu0 0.0
        %701 = vmatprep.subr.mxu0 0.0
        %702 = vmatpush1.msra.mxu0 0.0
        %703 = vmatprep.subr.mxu0 0.0
        %704 = vmatpush1.msra.mxu0 0.0
        %705 = vmatprep.subr.mxu0 0.0
        %706 = vmatpush1.msra.mxu0 0.0
        %707 = vmatprep.subr.mxu0 0.0
        %708 = vmatpush1.msra.mxu0 0.0
        %709 = vmatprep.subr.mxu0 0.0
        %710 = vmatpush1.msra.mxu0 0.0
        %711 = vmatprep.subr.mxu0 0.0
        %712 = vmatpush1.msra.mxu0 0.0
        %713 = vmatprep.subr.mxu0 0.0
        %714 = vmatpush1.msra.mxu0 0.0
        %715 = vmatprep.subr.mxu0 0.0
        %716 = vmatpush1.msra.mxu0 0.0
        %717 = vmatprep.subr.mxu0 0.0
        %718 = vmatpush1.msra.mxu0 0.0
        %719 = vmatprep.mubr.f32.mxu0 0.0
        %720 = vmatmul.mubr.f32.gmra.mrb[0].mxu0 %v647
        %v721 = vpop.f32.mrb[0].mxu0
        %v722 = vadd.f32 0.0, %v721
        %v723 = vpop.f32.mrb[0].mxu0
        %v724 = vadd.f32 0.0, %v723
        %725 = vdwg.mxu0
        %v726 = vadd.f32 %v624, %v722
        %v727 = vadd.f32 %v625, %v724
        %v728 = vld [vmem:[#allocation2 + $0x4] sm:$0xff]
        %s729 = scalar_lea.vmem %s1, 8
        %v730 = vld [vmem:[%s729] sm:$0x3]
        %v732 = vcombine.high %v728, %v728
        %v734 = vsel %vm360, %v730, 0
        %v736 = vsel %vm364, %v728, 0
        %v738 = vsel %vm364, %v732, 0
        %740 = vmatprep.subr.mxu0 %v738
        %741 = vmatpush1.msra.mxu0 %v736
        %742 = vmatprep.subr.mxu0 0.0
        %743 = vmatpush1.msra.mxu0 0.0
        %744 = vmatprep.subr.mxu0 0.0
        %745 = vmatpush1.msra.mxu0 0.0
        %746 = vmatprep.subr.mxu0 0.0
        %747 = vmatpush1.msra.mxu0 0.0
        %748 = vmatprep.subr.mxu0 0.0
        %749 = vmatpush1.msra.mxu0 0.0
        %750 = vmatprep.subr.mxu0 0.0
        %751 = vmatpush1.msra.mxu0 0.0
        %752 = vmatprep.subr.mxu0 0.0
        %753 = vmatpush1.msra.mxu0 0.0
        %754 = vmatprep.subr.mxu0 0.0
        %755 = vmatpush1.msra.mxu0 0.0
        %756 = vmatprep.subr.mxu0 0.0
        %757 = vmatpush1.msra.mxu0 0.0
        %758 = vmatprep.subr.mxu0 0.0
        %759 = vmatpush1.msra.mxu0 0.0
        %760 = vmatprep.subr.mxu0 0.0
        %761 = vmatpush1.msra.mxu0 0.0
        %762 = vmatprep.subr.mxu0 0.0
        %763 = vmatpush1.msra.mxu0 0.0
        %764 = vmatprep.subr.mxu0 0.0
        %765 = vmatpush1.msra.mxu0 0.0
        %766 = vmatprep.subr.mxu0 0.0
        %767 = vmatpush1.msra.mxu0 0.0
        %768 = vmatprep.subr.mxu0 0.0
        %769 = vmatpush1.msra.mxu0 0.0
        %770 = vmatprep.subr.mxu0 0.0
        %771 = vmatpush1.msra.mxu0 0.0
        %772 = vmatprep.subr.mxu0 0.0
        %773 = vmatpush1.msra.mxu0 0.0
        %774 = vmatprep.subr.mxu0 0.0
        %775 = vmatpush1.msra.mxu0 0.0
        %776 = vmatprep.subr.mxu0 0.0
        %777 = vmatpush1.msra.mxu0 0.0
        %778 = vmatprep.subr.mxu0 0.0
        %779 = vmatpush1.msra.mxu0 0.0
        %780 = vmatprep.subr.mxu0 0.0
        %781 = vmatpush1.msra.mxu0 0.0
        %782 = vmatprep.subr.mxu0 0.0
        %783 = vmatpush1.msra.mxu0 0.0
        %784 = vmatprep.subr.mxu0 0.0
        %785 = vmatpush1.msra.mxu0 0.0
        %786 = vmatprep.subr.mxu0 0.0
        %787 = vmatpush1.msra.mxu0 0.0
        %788 = vmatprep.subr.mxu0 0.0
        %789 = vmatpush1.msra.mxu0 0.0
        %790 = vmatprep.subr.mxu0 0.0
        %791 = vmatpush1.msra.mxu0 0.0
        %792 = vmatprep.subr.mxu0 0.0
        %793 = vmatpush1.msra.mxu0 0.0
        %794 = vmatprep.subr.mxu0 0.0
        %795 = vmatpush1.msra.mxu0 0.0
        %796 = vmatprep.subr.mxu0 0.0
        %797 = vmatpush1.msra.mxu0 0.0
        %798 = vmatprep.subr.mxu0 0.0
        %799 = vmatpush1.msra.mxu0 0.0
        %800 = vmatprep.subr.mxu0 0.0
        %801 = vmatpush1.msra.mxu0 0.0
        %802 = vmatprep.subr.mxu0 0.0
        %803 = vmatpush1.msra.mxu0 0.0
        %804 = vmatprep.mubr.f32.mxu0 0.0
        %805 = vmatmul.mubr.f32.gmra.mrb[0].mxu0 %v734
        %v806 = vpop.f32.mrb[0].mxu0
        %v807 = vadd.f32 0.0, %v806
        %v808 = vpop.f32.mrb[0].mxu0
        %v809 = vadd.f32 0.0, %v808
        %810 = vdwg.mxu0
        %v811 = vadd.f32 %v726, %v807
        %v812 = vadd.f32 %v727, %v809
        %v813 = vld [vmem:[#allocation2 + $0x4] sm:$0xff]
        %v814 = vld [vmem:[#allocation2 + $0xc] sm:$0xf]
        %v817 = vcombine.high %v813, %v813
        %818 = vrot.lane.b32.xlu0 %v813, 127
        %v819 = vpop.permute.xlu0 %818
        %820 = vrot.lane.b32.xlu0 %v817, 127
        %v821 = vpop.permute.xlu0 %820
        %822 = vrot.lane.b32.xlu0 %v814, 127
        %v823 = vpop.permute.xlu0 %822
        %vm824 = vcmask 1039360
        %v825 = vsel %vm824, %v819, %v821
        %v826 = vsel %vm824, %v821, %v823
        %v829 = vsel %vm524, %v825, 0.0
        %v830 = vsel %vm525, %v826, 0.0
        %s831 = scalar_lea.vmem %s1, 10
        %v832 = vld [vmem:[%s831] sm:$0x3]
        %v834 = vsel %vm360, %v832, 0
        %v837 = vsel %vm364, %v829, 0
        %v840 = vsel %vm364, %v830, 0
        %842 = vmatprep.subr.mxu0 %v840
        %843 = vmatpush1.msra.mxu0 %v837
        %844 = vmatprep.subr.mxu0 0.0
        %845 = vmatpush1.msra.mxu0 0.0
        %846 = vmatprep.subr.mxu0 0.0
        %847 = vmatpush1.msra.mxu0 0.0
        %848 = vmatprep.subr.mxu0 0.0
        %849 = vmatpush1.msra.mxu0 0.0
        %850 = vmatprep.subr.mxu0 0.0
        %851 = vmatpush1.msra.mxu0 0.0
        %852 = vmatprep.subr.mxu0 0.0
        %853 = vmatpush1.msra.mxu0 0.0
        %854 = vmatprep.subr.mxu0 0.0
        %855 = vmatpush1.msra.mxu0 0.0
        %856 = vmatprep.subr.mxu0 0.0
        %857 = vmatpush1.msra.mxu0 0.0
        %858 = vmatprep.subr.mxu0 0.0
        %859 = vmatpush1.msra.mxu0 0.0
        %860 = vmatprep.subr.mxu0 0.0
        %861 = vmatpush1.msra.mxu0 0.0
        %862 = vmatprep.subr.mxu0 0.0
        %863 = vmatpush1.msra.mxu0 0.0
        %864 = vmatprep.subr.mxu0 0.0
        %865 = vmatpush1.msra.mxu0 0.0
        %866 = vmatprep.subr.mxu0 0.0
        %867 = vmatpush1.msra.mxu0 0.0
        %868 = vmatprep.subr.mxu0 0.0
        %869 = vmatpush1.msra.mxu0 0.0
        %870 = vmatprep.subr.mxu0 0.0
        %871 = vmatpush1.msra.mxu0 0.0
        %872 = vmatprep.subr.mxu0 0.0
        %873 = vmatpush1.msra.mxu0 0.0
        %874 = vmatprep.subr.mxu0 0.0
        %875 = vmatpush1.msra.mxu0 0.0
        %876 = vmatprep.subr.mxu0 0.0
        %877 = vmatpush1.msra.mxu0 0.0
        %878 = vmatprep.subr.mxu0 0.0
        %879 = vmatpush1.msra.mxu0 0.0
        %880 = vmatprep.subr.mxu0 0.0
        %881 = vmatpush1.msra.mxu0 0.0
        %882 = vmatprep.subr.mxu0 0.0
        %883 = vmatpush1.msra.mxu0 0.0
        %884 = vmatprep.subr.mxu0 0.0
        %885 = vmatpush1.msra.mxu0 0.0
        %886 = vmatprep.subr.mxu0 0.0
        %887 = vmatpush1.msra.mxu0 0.0
        %888 = vmatprep.subr.mxu0 0.0
        %889 = vmatpush1.msra.mxu0 0.0
        %890 = vmatprep.subr.mxu0 0.0
        %891 = vmatpush1.msra.mxu0 0.0
        %892 = vmatprep.subr.mxu0 0.0
        %893 = vmatpush1.msra.mxu0 0.0
        %894 = vmatprep.subr.mxu0 0.0
        %895 = vmatpush1.msra.mxu0 0.0
        %896 = vmatprep.subr.mxu0 0.0
        %897 = vmatpush1.msra.mxu0 0.0
        %898 = vmatprep.subr.mxu0 0.0
        %899 = vmatpush1.msra.mxu0 0.0
        %900 = vmatprep.subr.mxu0 0.0
        %901 = vmatpush1.msra.mxu0 0.0
        %902 = vmatprep.subr.mxu0 0.0
        %903 = vmatpush1.msra.mxu0 0.0
        %904 = vmatprep.subr.mxu0 0.0
        %905 = vmatpush1.msra.mxu0 0.0
        %906 = vmatprep.mubr.f32.mxu0 0.0
        %907 = vmatmul.mubr.f32.gmra.mrb[0].mxu0 %v834
        %v908 = vpop.f32.mrb[0].mxu0
        %v909 = vadd.f32 0.0, %v908
        %v910 = vpop.f32.mrb[0].mxu0
        %v911 = vadd.f32 0.0, %v910
        %912 = vdwg.mxu0
        %v913 = vadd.f32 %v811, %v909
        %v914 = vadd.f32 %v812, %v911
        %v915 = vld [vmem:[#allocation2 + $0x4] sm:$0xff]
        %v916 = vld [vmem:[#allocation2 + $0xc] sm:$0xf]
        %v919 = vcombine.high %v915, %v915
        %920 = vrot.lane.b32.xlu0 %v915, 113
        %v921 = vpop.permute.xlu0 %920
        %922 = vrot.lane.b32.xlu0 %v919, 113
        %v923 = vpop.permute.xlu0 %922
        %924 = vrot.lane.b32.xlu0 %v916, 113
        %v925 = vpop.permute.xlu0 %924
        %vm926 = vcmask 924672
        %v927 = vsel %vm926, %v921, %v923
        %v928 = vsel %vm926, %v923, %v925
        %v931 = vsel %vm330, %v927, 0.0
        %v932 = vsel %vm331, %v928, 0.0
        %s933 = scalar_lea.vmem %s1, 12
        %v934 = vld [vmem:[%s933] sm:$0x3]
        %v936 = vsel %vm360, %v934, 0
        %v939 = vsel %vm364, %v931, 0
        %v942 = vsel %vm364, %v932, 0
        %944 = vmatprep.subr.mxu0 %v942
        %945 = vmatpush1.msra.mxu0 %v939
        %946 = vmatprep.subr.mxu0 0.0
        %947 = vmatpush1.msra.mxu0 0.0
        %948 = vmatprep.subr.mxu0 0.0
        %949 = vmatpush1.msra.mxu0 0.0
        %950 = vmatprep.subr.mxu0 0.0
        %951 = vmatpush1.msra.mxu0 0.0
        %952 = vmatprep.subr.mxu0 0.0
        %953 = vmatpush1.msra.mxu0 0.0
        %954 = vmatprep.subr.mxu0 0.0
        %955 = vmatpush1.msra.mxu0 0.0
        %956 = vmatprep.subr.mxu0 0.0
        %957 = vmatpush1.msra.mxu0 0.0
        %958 = vmatprep.subr.mxu0 0.0
        %959 = vmatpush1.msra.mxu0 0.0
        %960 = vmatprep.subr.mxu0 0.0
        %961 = vmatpush1.msra.mxu0 0.0
        %962 = vmatprep.subr.mxu0 0.0
        %963 = vmatpush1.msra.mxu0 0.0
        %964 = vmatprep.subr.mxu0 0.0
        %965 = vmatpush1.msra.mxu0 0.0
        %966 = vmatprep.subr.mxu0 0.0
        %967 = vmatpush1.msra.mxu0 0.0
        %968 = vmatprep.subr.mxu0 0.0
        %969 = vmatpush1.msra.mxu0 0.0
        %970 = vmatprep.subr.mxu0 0.0
        %971 = vmatpush1.msra.mxu0 0.0
        %972 = vmatprep.subr.mxu0 0.0
        %973 = vmatpush1.msra.mxu0 0.0
        %974 = vmatprep.subr.mxu0 0.0
        %975 = vmatpush1.msra.mxu0 0.0
        %976 = vmatprep.subr.mxu0 0.0
        %977 = vmatpush1.msra.mxu0 0.0
        %978 = vmatprep.subr.mxu0 0.0
        %979 = vmatpush1.msra.mxu0 0.0
        %980 = vmatprep.subr.mxu0 0.0
        %981 = vmatpush1.msra.mxu0 0.0
        %982 = vmatprep.subr.mxu0 0.0
        %983 = vmatpush1.msra.mxu0 0.0
        %984 = vmatprep.subr.mxu0 0.0
        %985 = vmatpush1.msra.mxu0 0.0
        %986 = vmatprep.subr.mxu0 0.0
        %987 = vmatpush1.msra.mxu0 0.0
        %988 = vmatprep.subr.mxu0 0.0
        %989 = vmatpush1.msra.mxu0 0.0
        %990 = vmatprep.subr.mxu0 0.0
        %991 = vmatpush1.msra.mxu0 0.0
        %992 = vmatprep.subr.mxu0 0.0
        %993 = vmatpush1.msra.mxu0 0.0
        %994 = vmatprep.subr.mxu0 0.0
        %995 = vmatpush1.msra.mxu0 0.0
        %996 = vmatprep.subr.mxu0 0.0
        %997 = vmatpush1.msra.mxu0 0.0
        %998 = vmatprep.subr.mxu0 0.0
        %999 = vmatpush1.msra.mxu0 0.0
        %1000 = vmatprep.subr.mxu0 0.0
        %1001 = vmatpush1.msra.mxu0 0.0
        %1002 = vmatprep.subr.mxu0 0.0
        %1003 = vmatpush1.msra.mxu0 0.0
        %1004 = vmatprep.subr.mxu0 0.0
        %1005 = vmatpush1.msra.mxu0 0.0
        %1006 = vmatprep.subr.mxu0 0.0
        %1007 = vmatpush1.msra.mxu0 0.0
        %1008 = vmatprep.mubr.f32.mxu0 0.0
        %1009 = vmatmul.mubr.f32.gmra.mrb[0].mxu0 %v936
        %v1010 = vpop.f32.mrb[0].mxu0
        %v1011 = vadd.f32 0.0, %v1010
        %v1012 = vpop.f32.mrb[0].mxu0
        %v1013 = vadd.f32 0.0, %v1012
        %1014 = vdwg.mxu0
        %v1015 = vadd.f32 %v913, %v1011
        %v1016 = vadd.f32 %v914, %v1013
        %v1017 = vld [vmem:[#allocation2 + $0x4] sm:$0xff]
        %v1018 = vld [vmem:[#allocation2 + $0xc] sm:$0xf]
        %s1019 = scalar_lea.vmem %s1, 14
        %v1020 = vld [vmem:[%s1019] sm:$0x3]
        %v1023 = vcombine.high %v1017, %v1017
        %1024 = vrot.lane.b32.xlu0 %v1017, 112
        %v1025 = vpop.permute.xlu0 %1024
        %1026 = vrot.lane.b32.xlu0 %v1023, 112
        %v1027 = vpop.permute.xlu0 %1026
        %1028 = vrot.lane.b32.xlu0 %v1018, 112
        %v1029 = vpop.permute.xlu0 %1028
        %vm1030 = vcmask 916480
        %v1031 = vsel %vm1030, %v1025, %v1027
        %v1032 = vsel %vm1030, %v1027, %v1029
        %v1034 = vsel %vm360, %v1020, 0
        %v1036 = vsel %vm364, %v1031, 0
        %v1038 = vsel %vm364, %v1032, 0
        %1040 = vmatprep.subr.mxu0 %v1038
        %1041 = vmatpush1.msra.mxu0 %v1036
        %1042 = vmatprep.subr.mxu0 0.0
        %1043 = vmatpush1.msra.mxu0 0.0
        %1044 = vmatprep.subr.mxu0 0.0
        %1045 = vmatpush1.msra.mxu0 0.0
        %1046 = vmatprep.subr.mxu0 0.0
        %1047 = vmatpush1.msra.mxu0 0.0
        %1048 = vmatprep.subr.mxu0 0.0
        %1049 = vmatpush1.msra.mxu0 0.0
        %1050 = vmatprep.subr.mxu0 0.0
        %1051 = vmatpush1.msra.mxu0 0.0
        %1052 = vmatprep.subr.mxu0 0.0
        %1053 = vmatpush1.msra.mxu0 0.0
        %1054 = vmatprep.subr.mxu0 0.0
        %1055 = vmatpush1.msra.mxu0 0.0
        %1056 = vmatprep.subr.mxu0 0.0
        %1057 = vmatpush1.msra.mxu0 0.0
        %1058 = vmatprep.subr.mxu0 0.0
        %1059 = vmatpush1.msra.mxu0 0.0
        %1060 = vmatprep.subr.mxu0 0.0
        %1061 = vmatpush1.msra.mxu0 0.0
        %1062 = vmatprep.subr.mxu0 0.0
        %1063 = vmatpush1.msra.mxu0 0.0
        %1064 = vmatprep.subr.mxu0 0.0
        %1065 = vmatpush1.msra.mxu0 0.0
        %1066 = vmatprep.subr.mxu0 0.0
        %1067 = vmatpush1.msra.mxu0 0.0
        %1068 = vmatprep.subr.mxu0 0.0
        %1069 = vmatpush1.msra.mxu0 0.0
        %1070 = vmatprep.subr.mxu0 0.0
        %1071 = vmatpush1.msra.mxu0 0.0
        %1072 = vmatprep.subr.mxu0 0.0
        %1073 = vmatpush1.msra.mxu0 0.0
        %1074 = vmatprep.subr.mxu0 0.0
        %1075 = vmatpush1.msra.mxu0 0.0
        %1076 = vmatprep.subr.mxu0 0.0
        %1077 = vmatpush1.msra.mxu0 0.0
        %1078 = vmatprep.subr.mxu0 0.0
        %1079 = vmatpush1.msra.mxu0 0.0
        %1080 = vmatprep.subr.mxu0 0.0
        %1081 = vmatpush1.msra.mxu0 0.0
        %1082 = vmatprep.subr.mxu0 0.0
        %1083 = vmatpush1.msra.mxu0 0.0
        %1084 = vmatprep.subr.mxu0 0.0
        %1085 = vmatpush1.msra.mxu0 0.0
        %1086 = vmatprep.subr.mxu0 0.0
        %1087 = vmatpush1.msra.mxu0 0.0
        %1088 = vmatprep.subr.mxu0 0.0
        %1089 = vmatpush1.msra.mxu0 0.0
        %1090 = vmatprep.subr.mxu0 0.0
        %1091 = vmatpush1.msra.mxu0 0.0
        %1092 = vmatprep.subr.mxu0 0.0
        %1093 = vmatpush1.msra.mxu0 0.0
        %1094 = vmatprep.subr.mxu0 0.0
        %1095 = vmatpush1.msra.mxu0 0.0
        %1096 = vmatprep.subr.mxu0 0.0
        %1097 = vmatpush1.msra.mxu0 0.0
        %1098 = vmatprep.subr.mxu0 0.0
        %1099 = vmatpush1.msra.mxu0 0.0
        %1100 = vmatprep.subr.mxu0 0.0
        %1101 = vmatpush1.msra.mxu0 0.0
        %1102 = vmatprep.subr.mxu0 0.0
        %1103 = vmatpush1.msra.mxu0 0.0
        %1104 = vmatprep.mubr.f32.mxu0 0.0
        %1105 = vmatmul.mubr.f32.gmra.mrb[0].mxu0 %v1034
        %v1106 = vpop.f32.mrb[0].mxu0
        %v1107 = vadd.f32 0.0, %v1106
        %v1108 = vpop.f32.mrb[0].mxu0
        %v1109 = vadd.f32 0.0, %v1108
        %1110 = vdwg.mxu0
        %v1111 = vadd.f32 %v1015, %v1107
        %v1112 = vadd.f32 %v1016, %v1109
        %v1113 = vld [vmem:[#allocation2 + $0x4] sm:$0xff]
        %v1114 = vld [vmem:[#allocation2 + $0xc] sm:$0xf]
        %v1117 = vcombine.high %v1113, %v1113
        %1118 = vrot.lane.b32.xlu0 %v1113, 111
        %v1119 = vpop.permute.xlu0 %1118
        %1120 = vrot.lane.b32.xlu0 %v1117, 111
        %v1121 = vpop.permute.xlu0 %1120
        %1122 = vrot.lane.b32.xlu0 %v1114, 111
        %v1123 = vpop.permute.xlu0 %1122
        %vm1124 = vcmask 908288
        %v1125 = vsel %vm1124, %v1119, %v1121
        %v1126 = vsel %vm1124, %v1121, %v1123
        %v1129 = vsel %vm524, %v1125, 0.0
        %v1130 = vsel %vm525, %v1126, 0.0
        %s1131 = scalar_lea.vmem %s1, 16
        %v1132 = vld [vmem:[%s1131] sm:$0x3]
        %v1134 = vsel %vm360, %v1132, 0
        %v1137 = vsel %vm364, %v1129, 0
        %v1140 = vsel %vm364, %v1130, 0
        %1142 = vmatprep.subr.mxu0 %v1140
        %1143 = vmatpush1.msra.mxu0 %v1137
        %1144 = vmatprep.subr.mxu0 0.0
        %1145 = vmatpush1.msra.mxu0 0.0
        %1146 = vmatprep.subr.mxu0 0.0
        %1147 = vmatpush1.msra.mxu0 0.0
        %1148 = vmatprep.subr.mxu0 0.0
        %1149 = vmatpush1.msra.mxu0 0.0
        %1150 = vmatprep.subr.mxu0 0.0
        %1151 = vmatpush1.msra.mxu0 0.0
        %1152 = vmatprep.subr.mxu0 0.0
        %1153 = vmatpush1.msra.mxu0 0.0
        %1154 = vmatprep.subr.mxu0 0.0
        %1155 = vmatpush1.msra.mxu0 0.0
        %1156 = vmatprep.subr.mxu0 0.0
        %1157 = vmatpush1.msra.mxu0 0.0
        %1158 = vmatprep.subr.mxu0 0.0
        %1159 = vmatpush1.msra.mxu0 0.0
        %1160 = vmatprep.subr.mxu0 0.0
        %1161 = vmatpush1.msra.mxu0 0.0
        %1162 = vmatprep.subr.mxu0 0.0
        %1163 = vmatpush1.msra.mxu0 0.0
        %1164 = vmatprep.subr.mxu0 0.0
        %1165 = vmatpush1.msra.mxu0 0.0
        %1166 = vmatprep.subr.mxu0 0.0
        %1167 = vmatpush1.msra.mxu0 0.0
        %1168 = vmatprep.subr.mxu0 0.0
        %1169 = vmatpush1.msra.mxu0 0.0
        %1170 = vmatprep.subr.mxu0 0.0
        %1171 = vmatpush1.msra.mxu0 0.0
        %1172 = vmatprep.subr.mxu0 0.0
        %1173 = vmatpush1.msra.mxu0 0.0
        %1174 = vmatprep.subr.mxu0 0.0
        %1175 = vmatpush1.msra.mxu0 0.0
        %1176 = vmatprep.subr.mxu0 0.0
        %1177 = vmatpush1.msra.mxu0 0.0
        %1178 = vmatprep.subr.mxu0 0.0
        %1179 = vmatpush1.msra.mxu0 0.0
        %1180 = vmatprep.subr.mxu0 0.0
        %1181 = vmatpush1.msra.mxu0 0.0
        %1182 = vmatprep.subr.mxu0 0.0
        %1183 = vmatpush1.msra.mxu0 0.0
        %1184 = vmatprep.subr.mxu0 0.0
        %1185 = vmatpush1.msra.mxu0 0.0
        %1186 = vmatprep.subr.mxu0 0.0
        %1187 = vmatpush1.msra.mxu0 0.0
        %1188 = vmatprep.subr.mxu0 0.0
        %1189 = vmatpush1.msra.mxu0 0.0
        %1190 = vmatprep.subr.mxu0 0.0
        %1191 = vmatpush1.msra.mxu0 0.0
        %1192 = vmatprep.subr.mxu0 0.0
        %1193 = vmatpush1.msra.mxu0 0.0
        %1194 = vmatprep.subr.mxu0 0.0
        %1195 = vmatpush1.msra.mxu0 0.0
        %1196 = vmatprep.subr.mxu0 0.0
        %1197 = vmatpush1.msra.mxu0 0.0
        %1198 = vmatprep.subr.mxu0 0.0
        %1199 = vmatpush1.msra.mxu0 0.0
        %1200 = vmatprep.subr.mxu0 0.0
        %1201 = vmatpush1.msra.mxu0 0.0
        %1202 = vmatprep.subr.mxu0 0.0
        %1203 = vmatpush1.msra.mxu0 0.0
        %1204 = vmatprep.subr.mxu0 0.0
        %1205 = vmatpush1.msra.mxu0 0.0
        %1206 = vmatprep.mubr.f32.mxu0 0.0
        %1207 = vmatmul.mubr.f32.gmra.mrb[0].mxu0 %v1134
        %v1208 = vpop.f32.mrb[0].mxu0
        %v1209 = vadd.f32 0.0, %v1208
        %v1210 = vpop.f32.mrb[0].mxu0
        %v1211 = vadd.f32 0.0, %v1210
        %1212 = vdwg.mxu0
        %v1213 = vadd.f32 %v1111, %v1209
        %v1214 = vadd.f32 %v1112, %v1211
        %v1215 = vld [vmem:[%s2] sm:$0x3]
        %1217 = vset.pattern.permute.xlu0 0
        %1218 = vperm.xlu0 %1217, %v1215
        %v1219 = vpop.permute.xlu0 %1218
        %v1221 = vmul.f32 %v1213, %v1219
        %v1222 = vmul.f32 %v1214, %v1219
        %v1223 = vld [vmem:[%s3] sm:$0x3]
        %1225 = vset.pattern.permute.xlu0 0
        %1226 = vperm.xlu0 %1225, %v1223
        %v1227 = vpop.permute.xlu0 %1226
        %v1229 = vadd.f32 %v1221, %v1227
        %v1230 = vadd.f32 %v1222, %v1227
        %v1231 = vxor.u32 %v1229, 2147483648
        %v1232 = vxor.u32 %v1230, 2147483648
        %v1233 = vmul.f32 %v1231, 1.442695
        %v1234 = vpow.pop %v1233
        %v1235 = vmul.f32 %v1232, 1.442695
        %v1236 = vpow.pop %v1235
        %v1237 = vadd.f32 %v1234, 1.0
        %v1238 = vadd.f32 %v1236, 1.0
        %v1239 = vrcp.pop %v1237
        %v1240 = vmul.f32 1.0, %v1239
        %v1241 = vrcp.pop %v1238
        %v1242 = vmul.f32 1.0, %v1241
        %v1243 = vmul.f32 %v1229, %v1240
        %v1244 = vmul.f32 %v1230, %v1242
        %v1247 = vcombine.low %v1243, %v1244
        %v1249 = vunpack.c.l.s4 1983009808
        %v1250 = vunpack.c.0.s8 %v1249
        %v1251 = vlaneseq
        %v1252 = vshrl.u32 %v1251, 7
        %v1253 = vsub.s32 %v1250, %v1252
        %v1254 = vrot.slane %v1247, %v1253
        %1256 = vst [vmem:[#allocation3 + $0x2] sm:$0xf] %v1254
        %v1257 = vld [vmem:[#allocation3] sm:$0x3f]
        %v1259 = vcombine.high %v1257, %v1257
        %v1261 = vunpack.c.l.s4 1983009808
        %v1262 = vunpack.c.0.s8 %v1261
        %v1263 = vlaneseq
        %v1264 = vshrl.u32 %v1263, 7
        %v1265 = vsub.s32 %v1262, %v1264
        %v1266 = vrot.slane %v1257, %v1265
        %v1268 = vunpack.c.l.s4 1983009808
        %v1269 = vunpack.c.0.s8 %v1268
        %v1270 = vlaneseq
        %v1271 = vshrl.u32 %v1270, 7
        %v1272 = vsub.s32 %v1269, %v1271
        %v1273 = vrot.slane %v1259, %v1272
        %v1274 = vcombine.high %v1266, %v1266
        %1275 = vrot.lane.b32.xlu0 %v1266, 17
        %v1276 = vpop.permute.xlu0 %1275
        %1277 = vrot.lane.b32.xlu0 %v1274, 17
        %v1278 = vpop.permute.xlu0 %1277
        %1279 = vrot.lane.b32.xlu0 %v1273, 17
        %v1280 = vpop.permute.xlu0 %1279
        %v1281 = vsel %vm341, %v1276, %v1278
        %v1282 = vsel %vm341, %v1278, %v1280
        %v1285 = vsel %vm330, %v1281, 0.0
        %v1286 = vsel %vm331, %v1282, 0.0
        %v1287 = vld [vmem:[%s4] sm:$0xf]
        %s1288 = scalar_lea.vmem %s4, 4
        %v1289 = vld [vmem:[%s1288] sm:$0xf]
        %1290 = vrot.lane.b32.xlu0 %v1266, 16
        %v1291 = vpop.permute.xlu0 %1290
        %1292 = vrot.lane.b32.xlu0 %v1274, 16
        %v1293 = vpop.permute.xlu0 %1292
        %1294 = vrot.lane.b32.xlu0 %v1273, 16
        %v1295 = vpop.permute.xlu0 %1294
        %v1296 = vsel %vm357, %v1291, %v1293
        %v1297 = vsel %vm357, %v1293, %v1295
        %vm1298 = vcmask 15360
        %v1300 = vsel %vm1298, %v1289, 0
        %vm1302 = vcmask 1041408
        %v1303 = vsel %vm1302, %v1296, 0
        %v1305 = vsel %vm1302, %v1297, 0
        %1307 = vmatprep.subr.mxu0 %v1305
        %1308 = vmatpush1.msra.mxu0 %v1303
        %1309 = vmatprep.subr.mxu0 0.0
        %1310 = vmatpush1.msra.mxu0 0.0
        %1311 = vmatprep.subr.mxu0 0.0
        %1312 = vmatpush1.msra.mxu0 0.0
        %1313 = vmatprep.subr.mxu0 0.0
        %1314 = vmatpush1.msra.mxu0 0.0
        %1315 = vmatprep.subr.mxu0 0.0
        %1316 = vmatpush1.msra.mxu0 0.0
        %1317 = vmatprep.subr.mxu0 0.0
        %1318 = vmatpush1.msra.mxu0 0.0
        %1319 = vmatprep.subr.mxu0 0.0
        %1320 = vmatpush1.msra.mxu0 0.0
        %1321 = vmatprep.subr.mxu0 0.0
        %1322 = vmatpush1.msra.mxu0 0.0
        %1323 = vmatprep.subr.mxu0 0.0
        %1324 = vmatpush1.msra.mxu0 0.0
        %1325 = vmatprep.subr.mxu0 0.0
        %1326 = vmatpush1.msra.mxu0 0.0
        %1327 = vmatprep.subr.mxu0 0.0
        %1328 = vmatpush1.msra.mxu0 0.0
        %1329 = vmatprep.subr.mxu0 0.0
        %1330 = vmatpush1.msra.mxu0 0.0
        %1331 = vmatprep.subr.mxu0 0.0
        %1332 = vmatpush1.msra.mxu0 0.0
        %1333 = vmatprep.subr.mxu0 0.0
        %1334 = vmatpush1.msra.mxu0 0.0
        %1335 = vmatprep.subr.mxu0 0.0
        %1336 = vmatpush1.msra.mxu0 0.0
        %1337 = vmatprep.subr.mxu0 0.0
        %1338 = vmatpush1.msra.mxu0 0.0
        %1339 = vmatprep.subr.mxu0 0.0
        %1340 = vmatpush1.msra.mxu0 0.0
        %1341 = vmatprep.subr.mxu0 0.0
        %1342 = vmatpush1.msra.mxu0 0.0
        %1343 = vmatprep.subr.mxu0 0.0
        %1344 = vmatpush1.msra.mxu0 0.0
        %1345 = vmatprep.subr.mxu0 0.0
        %1346 = vmatpush1.msra.mxu0 0.0
        %1347 = vmatprep.subr.mxu0 0.0
        %1348 = vmatpush1.msra.mxu0 0.0
        %1349 = vmatprep.subr.mxu0 0.0
        %1350 = vmatpush1.msra.mxu0 0.0
        %1351 = vmatprep.subr.mxu0 0.0
        %1352 = vmatpush1.msra.mxu0 0.0
        %1353 = vmatprep.subr.mxu0 0.0
        %1354 = vmatpush1.msra.mxu0 0.0
        %1355 = vmatprep.subr.mxu0 0.0
        %1356 = vmatpush1.msra.mxu0 0.0
        %1357 = vmatprep.subr.mxu0 0.0
        %1358 = vmatpush1.msra.mxu0 0.0
        %1359 = vmatprep.subr.mxu0 0.0
        %1360 = vmatpush1.msra.mxu0 0.0
        %1361 = vmatprep.subr.mxu0 0.0
        %1362 = vmatpush1.msra.mxu0 0.0
        %1363 = vmatprep.subr.mxu0 0.0
        %1364 = vmatpush1.msra.mxu0 0.0
        %1365 = vmatprep.subr.mxu0 0.0
        %1366 = vmatpush1.msra.mxu0 0.0
        %1367 = vmatprep.subr.mxu0 0.0
        %1368 = vmatpush1.msra.mxu0 0.0
        %1369 = vmatprep.subr.mxu0 0.0
        %1370 = vmatpush1.msra.mxu0 0.0
        %1371 = vmatprep.mubr.f32.mxu0 0.0
        %1372 = vmatmul.mubr.f32.gmra.mrb[0].mxu0 %v1300
        %v1373 = vpop.f32.mrb[0].mxu0
        %v1374 = vadd.f32 0.0, %v1373
        %v1375 = vpop.f32.mrb[0].mxu0
        %v1376 = vadd.f32 0.0, %v1375
        %1377 = vdwg.mxu0
        %v1379 = vsel %vm1298, %v1287, 0
        %v1382 = vsel %vm1302, %v1285, 0
        %v1385 = vsel %vm1302, %v1286, 0
        %1387 = vmatprep.subr.mxu0 %v1385
        %1388 = vmatpush1.msra.mxu0 %v1382
        %1389 = vmatprep.subr.mxu0 0.0
        %1390 = vmatpush1.msra.mxu0 0.0
        %1391 = vmatprep.subr.mxu0 0.0
        %1392 = vmatpush1.msra.mxu0 0.0
        %1393 = vmatprep.subr.mxu0 0.0
        %1394 = vmatpush1.msra.mxu0 0.0
        %1395 = vmatprep.subr.mxu0 0.0
        %1396 = vmatpush1.msra.mxu0 0.0
        %1397 = vmatprep.subr.mxu0 0.0
        %1398 = vmatpush1.msra.mxu0 0.0
        %1399 = vmatprep.subr.mxu0 0.0
        %1400 = vmatpush1.msra.mxu0 0.0
        %1401 = vmatprep.subr.mxu0 0.0
        %1402 = vmatpush1.msra.mxu0 0.0
        %1403 = vmatprep.subr.mxu0 0.0
        %1404 = vmatpush1.msra.mxu0 0.0
        %1405 = vmatprep.subr.mxu0 0.0
        %1406 = vmatpush1.msra.mxu0 0.0
        %1407 = vmatprep.subr.mxu0 0.0
        %1408 = vmatpush1.msra.mxu0 0.0
        %1409 = vmatprep.subr.mxu0 0.0
        %1410 = vmatpush1.msra.mxu0 0.0
        %1411 = vmatprep.subr.mxu0 0.0
        %1412 = vmatpush1.msra.mxu0 0.0
        %1413 = vmatprep.subr.mxu0 0.0
        %1414 = vmatpush1.msra.mxu0 0.0
        %1415 = vmatprep.subr.mxu0 0.0
        %1416 = vmatpush1.msra.mxu0 0.0
        %1417 = vmatprep.subr.mxu0 0.0
        %1418 = vmatpush1.msra.mxu0 0.0
        %1419 = vmatprep.subr.mxu0 0.0
        %1420 = vmatpush1.msra.mxu0 0.0
        %1421 = vmatprep.subr.mxu0 0.0
        %1422 = vmatpush1.msra.mxu0 0.0
        %1423 = vmatprep.subr.mxu0 0.0
        %1424 = vmatpush1.msra.mxu0 0.0
        %1425 = vmatprep.subr.mxu0 0.0
        %1426 = vmatpush1.msra.mxu0 0.0
        %1427 = vmatprep.subr.mxu0 0.0
        %1428 = vmatpush1.msra.mxu0 0.0
        %1429 = vmatprep.subr.mxu0 0.0
        %1430 = vmatpush1.msra.mxu0 0.0
        %1431 = vmatprep.subr.mxu0 0.0
        %1432 = vmatpush1.msra.mxu0 0.0
        %1433 = vmatprep.subr.mxu0 0.0
        %1434 = vmatpush1.msra.mxu0 0.0
        %1435 = vmatprep.subr.mxu0 0.0
        %1436 = vmatpush1.msra.mxu0 0.0
        %1437 = vmatprep.subr.mxu0 0.0
        %1438 = vmatpush1.msra.mxu0 0.0
        %1439 = vmatprep.subr.mxu0 0.0
        %1440 = vmatpush1.msra.mxu0 0.0
        %1441 = vmatprep.subr.mxu0 0.0
        %1442 = vmatpush1.msra.mxu0 0.0
        %1443 = vmatprep.subr.mxu0 0.0
        %1444 = vmatpush1.msra.mxu0 0.0
        %1445 = vmatprep.subr.mxu0 0.0
        %1446 = vmatpush1.msra.mxu0 0.0
        %1447 = vmatprep.subr.mxu0 0.0
        %1448 = vmatpush1.msra.mxu0 0.0
        %1449 = vmatprep.subr.mxu0 0.0
        %1450 = vmatpush1.msra.mxu0 0.0
        %1451 = vmatprep.mubr.f32.mxu0 0.0
        %1452 = vmatmul.mubr.f32.gmra.mrb[0].mxu0 %v1379
        %v1453 = vpop.f32.mrb[0].mxu0
        %v1454 = vadd.f32 %v1374, %v1453
        %v1455 = vpop.f32.mrb[0].mxu0
        %v1456 = vadd.f32 %v1376, %v1455
        %1457 = vdwg.mxu0
        %v1458 = vld [vmem:[#allocation3] sm:$0x3f]
        %v1460 = vcombine.high %v1458, %v1458
        %v1462 = vunpack.c.l.s4 1983009808
        %v1463 = vunpack.c.0.s8 %v1462
        %v1464 = vlaneseq
        %v1465 = vshrl.u32 %v1464, 7
        %v1466 = vsub.s32 %v1463, %v1465
        %v1467 = vrot.slane %v1458, %v1466
        %v1469 = vunpack.c.l.s4 1983009808
        %v1470 = vunpack.c.0.s8 %v1469
        %v1471 = vlaneseq
        %v1472 = vshrl.u32 %v1471, 7
        %v1473 = vsub.s32 %v1470, %v1472
        %v1474 = vrot.slane %v1460, %v1473
        %v1475 = vcombine.high %v1467, %v1467
        %1476 = vrot.lane.b32.xlu0 %v1467, 15
        %v1477 = vpop.permute.xlu0 %1476
        %1478 = vrot.lane.b32.xlu0 %v1475, 15
        %v1479 = vpop.permute.xlu0 %1478
        %1480 = vrot.lane.b32.xlu0 %v1474, 15
        %v1481 = vpop.permute.xlu0 %1480
        %v1482 = vsel %vm535, %v1477, %v1479
        %v1483 = vsel %vm535, %v1479, %v1481
        %v1486 = vsel %vm524, %v1482, 0.0
        %v1487 = vsel %vm525, %v1483, 0.0
        %s1488 = scalar_lea.vmem %s4, 8
        %v1489 = vld [vmem:[%s1488] sm:$0xf]
        %v1491 = vsel %vm1298, %v1489, 0
        %v1494 = vsel %vm1302, %v1486, 0
        %v1497 = vsel %vm1302, %v1487, 0
        %1499 = vmatprep.subr.mxu0 %v1497
        %1500 = vmatpush1.msra.mxu0 %v1494
        %1501 = vmatprep.subr.mxu0 0.0
        %1502 = vmatpush1.msra.mxu0 0.0
        %1503 = vmatprep.subr.mxu0 0.0
        %1504 = vmatpush1.msra.mxu0 0.0
        %1505 = vmatprep.subr.mxu0 0.0
        %1506 = vmatpush1.msra.mxu0 0.0
        %1507 = vmatprep.subr.mxu0 0.0
        %1508 = vmatpush1.msra.mxu0 0.0
        %1509 = vmatprep.subr.mxu0 0.0
        %1510 = vmatpush1.msra.mxu0 0.0
        %1511 = vmatprep.subr.mxu0 0.0
        %1512 = vmatpush1.msra.mxu0 0.0
        %1513 = vmatprep.subr.mxu0 0.0
        %1514 = vmatpush1.msra.mxu0 0.0
        %1515 = vmatprep.subr.mxu0 0.0
        %1516 = vmatpush1.msra.mxu0 0.0
        %1517 = vmatprep.subr.mxu0 0.0
        %1518 = vmatpush1.msra.mxu0 0.0
        %1519 = vmatprep.subr.mxu0 0.0
        %1520 = vmatpush1.msra.mxu0 0.0
        %1521 = vmatprep.subr.mxu0 0.0
        %1522 = vmatpush1.msra.mxu0 0.0
        %1523 = vmatprep.subr.mxu0 0.0
        %1524 = vmatpush1.msra.mxu0 0.0
        %1525 = vmatprep.subr.mxu0 0.0
        %1526 = vmatpush1.msra.mxu0 0.0
        %1527 = vmatprep.subr.mxu0 0.0
        %1528 = vmatpush1.msra.mxu0 0.0
        %1529 = vmatprep.subr.mxu0 0.0
        %1530 = vmatpush1.msra.mxu0 0.0
        %1531 = vmatprep.subr.mxu0 0.0
        %1532 = vmatpush1.msra.mxu0 0.0
        %1533 = vmatprep.subr.mxu0 0.0
        %1534 = vmatpush1.msra.mxu0 0.0
        %1535 = vmatprep.subr.mxu0 0.0
        %1536 = vmatpush1.msra.mxu0 0.0
        %1537 = vmatprep.subr.mxu0 0.0
        %1538 = vmatpush1.msra.mxu0 0.0
        %1539 = vmatprep.subr.mxu0 0.0
        %1540 = vmatpush1.msra.mxu0 0.0
        %1541 = vmatprep.subr.mxu0 0.0
        %1542 = vmatpush1.msra.mxu0 0.0
        %1543 = vmatprep.subr.mxu0 0.0
        %1544 = vmatpush1.msra.mxu0 0.0
        %1545 = vmatprep.subr.mxu0 0.0
        %1546 = vmatpush1.msra.mxu0 0.0
        %1547 = vmatprep.subr.mxu0 0.0
        %1548 = vmatpush1.msra.mxu0 0.0
        %1549 = vmatprep.subr.mxu0 0.0
        %1550 = vmatpush1.msra.mxu0 0.0
        %1551 = vmatprep.subr.mxu0 0.0
        %1552 = vmatpush1.msra.mxu0 0.0
        %1553 = vmatprep.subr.mxu0 0.0
        %1554 = vmatpush1.msra.mxu0 0.0
        %1555 = vmatprep.subr.mxu0 0.0
        %1556 = vmatpush1.msra.mxu0 0.0
        %1557 = vmatprep.subr.mxu0 0.0
        %1558 = vmatpush1.msra.mxu0 0.0
        %1559 = vmatprep.subr.mxu0 0.0
        %1560 = vmatpush1.msra.mxu0 0.0
        %1561 = vmatprep.subr.mxu0 0.0
        %1562 = vmatpush1.msra.mxu0 0.0
        %1563 = vmatprep.mubr.f32.mxu0 0.0
        %1564 = vmatmul.mubr.f32.gmra.mrb[0].mxu0 %v1491
        %v1565 = vpop.f32.mrb[0].mxu0
        %v1566 = vadd.f32 0.0, %v1565
        %v1567 = vpop.f32.mrb[0].mxu0
        %v1568 = vadd.f32 0.0, %v1567
        %1569 = vdwg.mxu0
        %v1570 = vadd.f32 %v1454, %v1566
        %v1571 = vadd.f32 %v1456, %v1568
        %v1572 = vld [vmem:[#allocation3] sm:$0x3f]
        %v1574 = vcombine.high %v1572, %v1572
        %v1576 = vunpack.c.l.s4 1983009808
        %v1577 = vunpack.c.0.s8 %v1576
        %v1578 = vlaneseq
        %v1579 = vshrl.u32 %v1578, 7
        %v1580 = vsub.s32 %v1577, %v1579
        %v1581 = vrot.slane %v1572, %v1580
        %v1583 = vunpack.c.l.s4 1983009808
        %v1584 = vunpack.c.0.s8 %v1583
        %v1585 = vlaneseq
        %v1586 = vshrl.u32 %v1585, 7
        %v1587 = vsub.s32 %v1584, %v1586
        %v1588 = vrot.slane %v1574, %v1587
        %v1589 = vcombine.high %v1581, %v1581
        %1590 = vrot.lane.b32.xlu0 %v1581, 1
        %v1591 = vpop.permute.xlu0 %1590
        %1592 = vrot.lane.b32.xlu0 %v1589, 1
        %v1593 = vpop.permute.xlu0 %1592
        %1594 = vrot.lane.b32.xlu0 %v1588, 1
        %v1595 = vpop.permute.xlu0 %1594
        %v1596 = vsel %vm637, %v1591, %v1593
        %v1597 = vsel %vm637, %v1593, %v1595
        %v1600 = vsel %vm330, %v1596, 0.0
        %v1601 = vsel %vm331, %v1597, 0.0
        %s1602 = scalar_lea.vmem %s4, 12
        %v1603 = vld [vmem:[%s1602] sm:$0xf]
        %v1605 = vsel %vm1298, %v1603, 0
        %v1608 = vsel %vm1302, %v1600, 0
        %v1611 = vsel %vm1302, %v1601, 0
        %1613 = vmatprep.subr.mxu0 %v1611
        %1614 = vmatpush1.msra.mxu0 %v1608
        %1615 = vmatprep.subr.mxu0 0.0
        %1616 = vmatpush1.msra.mxu0 0.0
        %1617 = vmatprep.subr.mxu0 0.0
        %1618 = vmatpush1.msra.mxu0 0.0
        %1619 = vmatprep.subr.mxu0 0.0
        %1620 = vmatpush1.msra.mxu0 0.0
        %1621 = vmatprep.subr.mxu0 0.0
        %1622 = vmatpush1.msra.mxu0 0.0
        %1623 = vmatprep.subr.mxu0 0.0
        %1624 = vmatpush1.msra.mxu0 0.0
        %1625 = vmatprep.subr.mxu0 0.0
        %1626 = vmatpush1.msra.mxu0 0.0
        %1627 = vmatprep.subr.mxu0 0.0
        %1628 = vmatpush1.msra.mxu0 0.0
        %1629 = vmatprep.subr.mxu0 0.0
        %1630 = vmatpush1.msra.mxu0 0.0
        %1631 = vmatprep.subr.mxu0 0.0
        %1632 = vmatpush1.msra.mxu0 0.0
        %1633 = vmatprep.subr.mxu0 0.0
        %1634 = vmatpush1.msra.mxu0 0.0
        %1635 = vmatprep.subr.mxu0 0.0
        %1636 = vmatpush1.msra.mxu0 0.0
        %1637 = vmatprep.subr.mxu0 0.0
        %1638 = vmatpush1.msra.mxu0 0.0
        %1639 = vmatprep.subr.mxu0 0.0
        %1640 = vmatpush1.msra.mxu0 0.0
        %1641 = vmatprep.subr.mxu0 0.0
        %1642 = vmatpush1.msra.mxu0 0.0
        %1643 = vmatprep.subr.mxu0 0.0
        %1644 = vmatpush1.msra.mxu0 0.0
        %1645 = vmatprep.subr.mxu0 0.0
        %1646 = vmatpush1.msra.mxu0 0.0
        %1647 = vmatprep.subr.mxu0 0.0
        %1648 = vmatpush1.msra.mxu0 0.0
        %1649 = vmatprep.subr.mxu0 0.0
        %1650 = vmatpush1.msra.mxu0 0.0
        %1651 = vmatprep.subr.mxu0 0.0
        %1652 = vmatpush1.msra.mxu0 0.0
        %1653 = vmatprep.subr.mxu0 0.0
        %1654 = vmatpush1.msra.mxu0 0.0
        %1655 = vmatprep.subr.mxu0 0.0
        %1656 = vmatpush1.msra.mxu0 0.0
        %1657 = vmatprep.subr.mxu0 0.0
        %1658 = vmatpush1.msra.mxu0 0.0
        %1659 = vmatprep.subr.mxu0 0.0
        %1660 = vmatpush1.msra.mxu0 0.0
        %1661 = vmatprep.subr.mxu0 0.0
        %1662 = vmatpush1.msra.mxu0 0.0
        %1663 = vmatprep.subr.mxu0 0.0
        %1664 = vmatpush1.msra.mxu0 0.0
        %1665 = vmatprep.subr.mxu0 0.0
        %1666 = vmatpush1.msra.mxu0 0.0
        %1667 = vmatprep.subr.mxu0 0.0
        %1668 = vmatpush1.msra.mxu0 0.0
        %1669 = vmatprep.subr.mxu0 0.0
        %1670 = vmatpush1.msra.mxu0 0.0
        %1671 = vmatprep.subr.mxu0 0.0
        %1672 = vmatpush1.msra.mxu0 0.0
        %1673 = vmatprep.subr.mxu0 0.0
        %1674 = vmatpush1.msra.mxu0 0.0
        %1675 = vmatprep.subr.mxu0 0.0
        %1676 = vmatpush1.msra.mxu0 0.0
        %1677 = vmatprep.mubr.f32.mxu0 0.0
        %1678 = vmatmul.mubr.f32.gmra.mrb[0].mxu0 %v1605
        %v1679 = vpop.f32.mrb[0].mxu0
        %v1680 = vadd.f32 0.0, %v1679
        %v1681 = vpop.f32.mrb[0].mxu0
        %v1682 = vadd.f32 0.0, %v1681
        %1683 = vdwg.mxu0
        %v1684 = vadd.f32 %v1570, %v1680
        %v1685 = vadd.f32 %v1571, %v1682
        %v1686 = vld [vmem:[#allocation3 + $0x2] sm:$0xf]
        %s1687 = scalar_lea.vmem %s4, 16
        %v1688 = vld [vmem:[%s1687] sm:$0xf]
        %v1691 = vunpack.c.l.s4 1983009808
        %v1692 = vunpack.c.0.s8 %v1691
        %v1693 = vlaneseq
        %v1694 = vshrl.u32 %v1693, 7
        %v1695 = vsub.s32 %v1692, %v1694
        %v1696 = vrot.slane %v1686, %v1695
        %v1697 = vcombine.high %v1696, %v1696
        %v1699 = vsel %vm1298, %v1688, 0
        %v1701 = vsel %vm1302, %v1696, 0
        %v1703 = vsel %vm1302, %v1697, 0
        %1705 = vmatprep.subr.mxu0 %v1703
        %1706 = vmatpush1.msra.mxu0 %v1701
        %1707 = vmatprep.subr.mxu0 0.0
        %1708 = vmatpush1.msra.mxu0 0.0
        %1709 = vmatprep.subr.mxu0 0.0
        %1710 = vmatpush1.msra.mxu0 0.0
        %1711 = vmatprep.subr.mxu0 0.0
        %1712 = vmatpush1.msra.mxu0 0.0
        %1713 = vmatprep.subr.mxu0 0.0
        %1714 = vmatpush1.msra.mxu0 0.0
        %1715 = vmatprep.subr.mxu0 0.0
        %1716 = vmatpush1.msra.mxu0 0.0
        %1717 = vmatprep.subr.mxu0 0.0
        %1718 = vmatpush1.msra.mxu0 0.0
        %1719 = vmatprep.subr.mxu0 0.0
        %1720 = vmatpush1.msra.mxu0 0.0
        %1721 = vmatprep.subr.mxu0 0.0
        %1722 = vmatpush1.msra.mxu0 0.0
        %1723 = vmatprep.subr.mxu0 0.0
        %1724 = vmatpush1.msra.mxu0 0.0
        %1725 = vmatprep.subr.mxu0 0.0
        %1726 = vmatpush1.msra.mxu0 0.0
        %1727 = vmatprep.subr.mxu0 0.0
        %1728 = vmatpush1.msra.mxu0 0.0
        %1729 = vmatprep.subr.mxu0 0.0
        %1730 = vmatpush1.msra.mxu0 0.0
        %1731 = vmatprep.subr.mxu0 0.0
        %1732 = vmatpush1.msra.mxu0 0.0
        %1733 = vmatprep.subr.mxu0 0.0
        %1734 = vmatpush1.msra.mxu0 0.0
        %1735 = vmatprep.subr.mxu0 0.0
        %1736 = vmatpush1.msra.mxu0 0.0
        %1737 = vmatprep.subr.mxu0 0.0
        %1738 = vmatpush1.msra.mxu0 0.0
        %1739 = vmatprep.subr.mxu0 0.0
        %1740 = vmatpush1.msra.mxu0 0.0
        %1741 = vmatprep.subr.mxu0 0.0
        %1742 = vmatpush1.msra.mxu0 0.0
        %1743 = vmatprep.subr.mxu0 0.0
        %1744 = vmatpush1.msra.mxu0 0.0
        %1745 = vmatprep.subr.mxu0 0.0
        %1746 = vmatpush1.msra.mxu0 0.0
        %1747 = vmatprep.subr.mxu0 0.0
        %1748 = vmatpush1.msra.mxu0 0.0
        %1749 = vmatprep.subr.mxu0 0.0
        %1750 = vmatpush1.msra.mxu0 0.0
        %1751 = vmatprep.subr.mxu0 0.0
        %1752 = vmatpush1.msra.mxu0 0.0
        %1753 = vmatprep.subr.mxu0 0.0
        %1754 = vmatpush1.msra.mxu0 0.0
        %1755 = vmatprep.subr.mxu0 0.0
        %1756 = vmatpush1.msra.mxu0 0.0
        %1757 = vmatprep.subr.mxu0 0.0
        %1758 = vmatpush1.msra.mxu0 0.0
        %1759 = vmatprep.subr.mxu0 0.0
        %1760 = vmatpush1.msra.mxu0 0.0
        %1761 = vmatprep.subr.mxu0 0.0
        %1762 = vmatpush1.msra.mxu0 0.0
        %1763 = vmatprep.subr.mxu0 0.0
        %1764 = vmatpush1.msra.mxu0 0.0
        %1765 = vmatprep.subr.mxu0 0.0
        %1766 = vmatpush1.msra.mxu0 0.0
        %1767 = vmatprep.subr.mxu0 0.0
        %1768 = vmatpush1.msra.mxu0 0.0
        %1769 = vmatprep.mubr.f32.mxu0 0.0
        %1770 = vmatmul.mubr.f32.gmra.mrb[0].mxu0 %v1699
        %v1771 = vpop.f32.mrb[0].mxu0
        %v1772 = vadd.f32 0.0, %v1771
        %v1773 = vpop.f32.mrb[0].mxu0
        %v1774 = vadd.f32 0.0, %v1773
        %1775 = vdwg.mxu0
        %v1776 = vadd.f32 %v1684, %v1772
        %v1777 = vadd.f32 %v1685, %v1774
        %v1778 = vld [vmem:[#allocation3 + $0x2] sm:$0x3f]
        %v1780 = vcombine.high %v1778, %v1778
        %v1782 = vunpack.c.l.s4 1983009808
        %v1783 = vunpack.c.0.s8 %v1782
        %v1784 = vlaneseq
        %v1785 = vshrl.u32 %v1784, 7
        %v1786 = vsub.s32 %v1783, %v1785
        %v1787 = vrot.slane %v1778, %v1786
        %v1789 = vunpack.c.l.s4 1983009808
        %v1790 = vunpack.c.0.s8 %v1789
        %v1791 = vlaneseq
        %v1792 = vshrl.u32 %v1791, 7
        %v1793 = vsub.s32 %v1790, %v1792
        %v1794 = vrot.slane %v1780, %v1793
        %v1795 = vcombine.high %v1787, %v1787
        %1796 = vrot.lane.b32.xlu0 %v1787, 127
        %v1797 = vpop.permute.xlu0 %1796
        %1798 = vrot.lane.b32.xlu0 %v1795, 127
        %v1799 = vpop.permute.xlu0 %1798
        %1800 = vrot.lane.b32.xlu0 %v1794, 127
        %v1801 = vpop.permute.xlu0 %1800
        %v1802 = vsel %vm824, %v1797, %v1799
        %v1803 = vsel %vm824, %v1799, %v1801
        %v1806 = vsel %vm524, %v1802, 0.0
        %v1807 = vsel %vm525, %v1803, 0.0
        %s1808 = scalar_lea.vmem %s4, 20
        %v1809 = vld [vmem:[%s1808] sm:$0xf]
        %v1811 = vsel %vm1298, %v1809, 0
        %v1814 = vsel %vm1302, %v1806, 0
        %v1817 = vsel %vm1302, %v1807, 0
        %1819 = vmatprep.subr.mxu0 %v1817
        %1820 = vmatpush1.msra.mxu0 %v1814
        %1821 = vmatprep.subr.mxu0 0.0
        %1822 = vmatpush1.msra.mxu0 0.0
        %1823 = vmatprep.subr.mxu0 0.0
        %1824 = vmatpush1.msra.mxu0 0.0
        %1825 = vmatprep.subr.mxu0 0.0
        %1826 = vmatpush1.msra.mxu0 0.0
        %1827 = vmatprep.subr.mxu0 0.0
        %1828 = vmatpush1.msra.mxu0 0.0
        %1829 = vmatprep.subr.mxu0 0.0
        %1830 = vmatpush1.msra.mxu0 0.0
        %1831 = vmatprep.subr.mxu0 0.0
        %1832 = vmatpush1.msra.mxu0 0.0
        %1833 = vmatprep.subr.mxu0 0.0
        %1834 = vmatpush1.msra.mxu0 0.0
        %1835 = vmatprep.subr.mxu0 0.0
        %1836 = vmatpush1.msra.mxu0 0.0
        %1837 = vmatprep.subr.mxu0 0.0
        %1838 = vmatpush1.msra.mxu0 0.0
        %1839 = vmatprep.subr.mxu0 0.0
        %1840 = vmatpush1.msra.mxu0 0.0
        %1841 = vmatprep.subr.mxu0 0.0
        %1842 = vmatpush1.msra.mxu0 0.0
        %1843 = vmatprep.subr.mxu0 0.0
        %1844 = vmatpush1.msra.mxu0 0.0
        %1845 = vmatprep.subr.mxu0 0.0
        %1846 = vmatpush1.msra.mxu0 0.0
        %1847 = vmatprep.subr.mxu0 0.0
        %1848 = vmatpush1.msra.mxu0 0.0
        %1849 = vmatprep.subr.mxu0 0.0
        %1850 = vmatpush1.msra.mxu0 0.0
        %1851 = vmatprep.subr.mxu0 0.0
        %1852 = vmatpush1.msra.mxu0 0.0
        %1853 = vmatprep.subr.mxu0 0.0
        %1854 = vmatpush1.msra.mxu0 0.0
        %1855 = vmatprep.subr.mxu0 0.0
        %1856 = vmatpush1.msra.mxu0 0.0
        %1857 = vmatprep.subr.mxu0 0.0
        %1858 = vmatpush1.msra.mxu0 0.0
        %1859 = vmatprep.subr.mxu0 0.0
        %1860 = vmatpush1.msra.mxu0 0.0
        %1861 = vmatprep.subr.mxu0 0.0
        %1862 = vmatpush1.msra.mxu0 0.0
        %1863 = vmatprep.subr.mxu0 0.0
        %1864 = vmatpush1.msra.mxu0 0.0
        %1865 = vmatprep.subr.mxu0 0.0
        %1866 = vmatpush1.msra.mxu0 0.0
        %1867 = vmatprep.subr.mxu0 0.0
        %1868 = vmatpush1.msra.mxu0 0.0
        %1869 = vmatprep.subr.mxu0 0.0
        %1870 = vmatpush1.msra.mxu0 0.0
        %1871 = vmatprep.subr.mxu0 0.0
        %1872 = vmatpush1.msra.mxu0 0.0
        %1873 = vmatprep.subr.mxu0 0.0
        %1874 = vmatpush1.msra.mxu0 0.0
        %1875 = vmatprep.subr.mxu0 0.0
        %1876 = vmatpush1.msra.mxu0 0.0
        %1877 = vmatprep.subr.mxu0 0.0
        %1878 = vmatpush1.msra.mxu0 0.0
        %1879 = vmatprep.subr.mxu0 0.0
        %1880 = vmatpush1.msra.mxu0 0.0
        %1881 = vmatprep.subr.mxu0 0.0
        %1882 = vmatpush1.msra.mxu0 0.0
        %1883 = vmatprep.mubr.f32.mxu0 0.0
        %1884 = vmatmul.mubr.f32.gmra.mrb[0].mxu0 %v1811
        %v1885 = vpop.f32.mrb[0].mxu0
        %v1886 = vadd.f32 0.0, %v1885
        %v1887 = vpop.f32.mrb[0].mxu0
        %v1888 = vadd.f32 0.0, %v1887
        %1889 = vdwg.mxu0
        %v1890 = vadd.f32 %v1776, %v1886
        %v1891 = vadd.f32 %v1777, %v1888
        %v1892 = vld [vmem:[#allocation3 + $0x2] sm:$0x3f]
        %v1894 = vcombine.high %v1892, %v1892
        %v1896 = vunpack.c.l.s4 1983009808
        %v1897 = vunpack.c.0.s8 %v1896
        %v1898 = vlaneseq
        %v1899 = vshrl.u32 %v1898, 7
        %v1900 = vsub.s32 %v1897, %v1899
        %v1901 = vrot.slane %v1892, %v1900
        %v1903 = vunpack.c.l.s4 1983009808
        %v1904 = vunpack.c.0.s8 %v1903
        %v1905 = vlaneseq
        %v1906 = vshrl.u32 %v1905, 7
        %v1907 = vsub.s32 %v1904, %v1906
        %v1908 = vrot.slane %v1894, %v1907
        %v1909 = vcombine.high %v1901, %v1901
        %1910 = vrot.lane.b32.xlu0 %v1901, 113
        %v1911 = vpop.permute.xlu0 %1910
        %1912 = vrot.lane.b32.xlu0 %v1909, 113
        %v1913 = vpop.permute.xlu0 %1912
        %1914 = vrot.lane.b32.xlu0 %v1908, 113
        %v1915 = vpop.permute.xlu0 %1914
        %v1916 = vsel %vm926, %v1911, %v1913
        %v1917 = vsel %vm926, %v1913, %v1915
        %v1920 = vsel %vm330, %v1916, 0.0
        %v1921 = vsel %vm331, %v1917, 0.0
        %s1922 = scalar_lea.vmem %s4, 24
        %v1923 = vld [vmem:[%s1922] sm:$0xf]
        %v1925 = vsel %vm1298, %v1923, 0
        %v1928 = vsel %vm1302, %v1920, 0
        %v1931 = vsel %vm1302, %v1921, 0
        %1933 = vmatprep.subr.mxu0 %v1931
        %1934 = vmatpush1.msra.mxu0 %v1928
        %1935 = vmatprep.subr.mxu0 0.0
        %1936 = vmatpush1.msra.mxu0 0.0
        %1937 = vmatprep.subr.mxu0 0.0
        %1938 = vmatpush1.msra.mxu0 0.0
        %1939 = vmatprep.subr.mxu0 0.0
        %1940 = vmatpush1.msra.mxu0 0.0
        %1941 = vmatprep.subr.mxu0 0.0
        %1942 = vmatpush1.msra.mxu0 0.0
        %1943 = vmatprep.subr.mxu0 0.0
        %1944 = vmatpush1.msra.mxu0 0.0
        %1945 = vmatprep.subr.mxu0 0.0
        %1946 = vmatpush1.msra.mxu0 0.0
        %1947 = vmatprep.subr.mxu0 0.0
        %1948 = vmatpush1.msra.mxu0 0.0
        %1949 = vmatprep.subr.mxu0 0.0
        %1950 = vmatpush1.msra.mxu0 0.0
        %1951 = vmatprep.subr.mxu0 0.0
        %1952 = vmatpush1.msra.mxu0 0.0
        %1953 = vmatprep.subr.mxu0 0.0
        %1954 = vmatpush1.msra.mxu0 0.0
        %1955 = vmatprep.subr.mxu0 0.0
        %1956 = vmatpush1.msra.mxu0 0.0
        %1957 = vmatprep.subr.mxu0 0.0
        %1958 = vmatpush1.msra.mxu0 0.0
        %1959 = vmatprep.subr.mxu0 0.0
        %1960 = vmatpush1.msra.mxu0 0.0
        %1961 = vmatprep.subr.mxu0 0.0
        %1962 = vmatpush1.msra.mxu0 0.0
        %1963 = vmatprep.subr.mxu0 0.0
        %1964 = vmatpush1.msra.mxu0 0.0
        %1965 = vmatprep.subr.mxu0 0.0
        %1966 = vmatpush1.msra.mxu0 0.0
        %1967 = vmatprep.subr.mxu0 0.0
        %1968 = vmatpush1.msra.mxu0 0.0
        %1969 = vmatprep.subr.mxu0 0.0
        %1970 = vmatpush1.msra.mxu0 0.0
        %1971 = vmatprep.subr.mxu0 0.0
        %1972 = vmatpush1.msra.mxu0 0.0
        %1973 = vmatprep.subr.mxu0 0.0
        %1974 = vmatpush1.msra.mxu0 0.0
        %1975 = vmatprep.subr.mxu0 0.0
        %1976 = vmatpush1.msra.mxu0 0.0
        %1977 = vmatprep.subr.mxu0 0.0
        %1978 = vmatpush1.msra.mxu0 0.0
        %1979 = vmatprep.subr.mxu0 0.0
        %1980 = vmatpush1.msra.mxu0 0.0
        %1981 = vmatprep.subr.mxu0 0.0
        %1982 = vmatpush1.msra.mxu0 0.0
        %1983 = vmatprep.subr.mxu0 0.0
        %1984 = vmatpush1.msra.mxu0 0.0
        %1985 = vmatprep.subr.mxu0 0.0
        %1986 = vmatpush1.msra.mxu0 0.0
        %1987 = vmatprep.subr.mxu0 0.0
        %1988 = vmatpush1.msra.mxu0 0.0
        %1989 = vmatprep.subr.mxu0 0.0
        %1990 = vmatpush1.msra.mxu0 0.0
        %1991 = vmatprep.subr.mxu0 0.0
        %1992 = vmatpush1.msra.mxu0 0.0
        %1993 = vmatprep.subr.mxu0 0.0
        %1994 = vmatpush1.msra.mxu0 0.0
        %1995 = vmatprep.subr.mxu0 0.0
        %1996 = vmatpush1.msra.mxu0 0.0
        %1997 = vmatprep.mubr.f32.mxu0 0.0
        %1998 = vmatmul.mubr.f32.gmra.mrb[0].mxu0 %v1925
        %v1999 = vpop.f32.mrb[0].mxu0
        %v2000 = vadd.f32 0.0, %v1999
        %v2001 = vpop.f32.mrb[0].mxu0
        %v2002 = vadd.f32 0.0, %v2001
        %2003 = vdwg.mxu0
        %v2004 = vadd.f32 %v1890, %v2000
        %v2005 = vadd.f32 %v1891, %v2002
        %v2006 = vld [vmem:[#allocation3 + $0x2] sm:$0x3f]
        %s2007 = scalar_lea.vmem %s4, 28
        %v2008 = vld [vmem:[%s2007] sm:$0xf]
        %v2010 = vcombine.high %v2006, %v2006
        %v2012 = vunpack.c.l.s4 1983009808
        %v2013 = vunpack.c.0.s8 %v2012
        %v2014 = vlaneseq
        %v2015 = vshrl.u32 %v2014, 7
        %v2016 = vsub.s32 %v2013, %v2015
        %v2017 = vrot.slane %v2006, %v2016
        %v2019 = vunpack.c.l.s4 1983009808
        %v2020 = vunpack.c.0.s8 %v2019
        %v2021 = vlaneseq
        %v2022 = vshrl.u32 %v2021, 7
        %v2023 = vsub.s32 %v2020, %v2022
        %v2024 = vrot.slane %v2010, %v2023
        %v2025 = vcombine.high %v2017, %v2017
        %2026 = vrot.lane.b32.xlu0 %v2017, 112
        %v2027 = vpop.permute.xlu0 %2026
        %2028 = vrot.lane.b32.xlu0 %v2025, 112
        %v2029 = vpop.permute.xlu0 %2028
        %2030 = vrot.lane.b32.xlu0 %v2024, 112
        %v2031 = vpop.permute.xlu0 %2030
        %v2032 = vsel %vm1030, %v2027, %v2029
        %v2033 = vsel %vm1030, %v2029, %v2031
        %v2035 = vsel %vm1298, %v2008, 0
        %v2037 = vsel %vm1302, %v2032, 0
        %v2039 = vsel %vm1302, %v2033, 0
        %2041 = vmatprep.subr.mxu0 %v2039
        %2042 = vmatpush1.msra.mxu0 %v2037
        %2043 = vmatprep.subr.mxu0 0.0
        %2044 = vmatpush1.msra.mxu0 0.0
        %2045 = vmatprep.subr.mxu0 0.0
        %2046 = vmatpush1.msra.mxu0 0.0
        %2047 = vmatprep.subr.mxu0 0.0
        %2048 = vmatpush1.msra.mxu0 0.0
        %2049 = vmatprep.subr.mxu0 0.0
        %2050 = vmatpush1.msra.mxu0 0.0
        %2051 = vmatprep.subr.mxu0 0.0
        %2052 = vmatpush1.msra.mxu0 0.0
        %2053 = vmatprep.subr.mxu0 0.0
        %2054 = vmatpush1.msra.mxu0 0.0
        %2055 = vmatprep.subr.mxu0 0.0
        %2056 = vmatpush1.msra.mxu0 0.0
        %2057 = vmatprep.subr.mxu0 0.0
        %2058 = vmatpush1.msra.mxu0 0.0
        %2059 = vmatprep.subr.mxu0 0.0
        %2060 = vmatpush1.msra.mxu0 0.0
        %2061 = vmatprep.subr.mxu0 0.0
        %2062 = vmatpush1.msra.mxu0 0.0
        %2063 = vmatprep.subr.mxu0 0.0
        %2064 = vmatpush1.msra.mxu0 0.0
        %2065 = vmatprep.subr.mxu0 0.0
        %2066 = vmatpush1.msra.mxu0 0.0
        %2067 = vmatprep.subr.mxu0 0.0
        %2068 = vmatpush1.msra.mxu0 0.0
        %2069 = vmatprep.subr.mxu0 0.0
        %2070 = vmatpush1.msra.mxu0 0.0
        %2071 = vmatprep.subr.mxu0 0.0
        %2072 = vmatpush1.msra.mxu0 0.0
        %2073 = vmatprep.subr.mxu0 0.0
        %2074 = vmatpush1.msra.mxu0 0.0
        %2075 = vmatprep.subr.mxu0 0.0
        %2076 = vmatpush1.msra.mxu0 0.0
        %2077 = vmatprep.subr.mxu0 0.0
        %2078 = vmatpush1.msra.mxu0 0.0
        %2079 = vmatprep.subr.mxu0 0.0
        %2080 = vmatpush1.msra.mxu0 0.0
        %2081 = vmatprep.subr.mxu0 0.0
        %2082 = vmatpush1.msra.mxu0 0.0
        %2083 = vmatprep.subr.mxu0 0.0
        %2084 = vmatpush1.msra.mxu0 0.0
        %2085 = vmatprep.subr.mxu0 0.0
        %2086 = vmatpush1.msra.mxu0 0.0
        %2087 = vmatprep.subr.mxu0 0.0
        %2088 = vmatpush1.msra.mxu0 0.0
        %2089 = vmatprep.subr.mxu0 0.0
        %2090 = vmatpush1.msra.mxu0 0.0
        %2091 = vmatprep.subr.mxu0 0.0
        %2092 = vmatpush1.msra.mxu0 0.0
        %2093 = vmatprep.subr.mxu0 0.0
        %2094 = vmatpush1.msra.mxu0 0.0
        %2095 = vmatprep.subr.mxu0 0.0
        %2096 = vmatpush1.msra.mxu0 0.0
        %2097 = vmatprep.subr.mxu0 0.0
        %2098 = vmatpush1.msra.mxu0 0.0
        %2099 = vmatprep.subr.mxu0 0.0
        %2100 = vmatpush1.msra.mxu0 0.0
        %2101 = vmatprep.subr.mxu0 0.0
        %2102 = vmatpush1.msra.mxu0 0.0
        %2103 = vmatprep.subr.mxu0 0.0
        %2104 = vmatpush1.msra.mxu0 0.0
        %2105 = vmatprep.mubr.f32.mxu0 0.0
        %2106 = vmatmul.mubr.f32.gmra.mrb[0].mxu0 %v2035
        %v2107 = vpop.f32.mrb[0].mxu0
        %v2108 = vadd.f32 0.0, %v2107
        %v2109 = vpop.f32.mrb[0].mxu0
        %v2110 = vadd.f32 0.0, %v2109
        %2111 = vdwg.mxu0
        %v2112 = vadd.f32 %v2004, %v2108
        %v2113 = vadd.f32 %v2005, %v2110
        %v2114 = vld [vmem:[#allocation3 + $0x2] sm:$0x3f]
        %v2116 = vcombine.high %v2114, %v2114
        %v2118 = vunpack.c.l.s4 1983009808
        %v2119 = vunpack.c.0.s8 %v2118
        %v2120 = vlaneseq
        %v2121 = vshrl.u32 %v2120, 7
        %v2122 = vsub.s32 %v2119, %v2121
        %v2123 = vrot.slane %v2114, %v2122
        %v2125 = vunpack.c.l.s4 1983009808
        %v2126 = vunpack.c.0.s8 %v2125
        %v2127 = vlaneseq
        %v2128 = vshrl.u32 %v2127, 7
        %v2129 = vsub.s32 %v2126, %v2128
        %v2130 = vrot.slane %v2116, %v2129
        %v2131 = vcombine.high %v2123, %v2123
        %2132 = vrot.lane.b32.xlu0 %v2123, 111
        %v2133 = vpop.permute.xlu0 %2132
        %2134 = vrot.lane.b32.xlu0 %v2131, 111
        %v2135 = vpop.permute.xlu0 %2134
        %2136 = vrot.lane.b32.xlu0 %v2130, 111
        %v2137 = vpop.permute.xlu0 %2136
        %v2138 = vsel %vm1124, %v2133, %v2135
        %v2139 = vsel %vm1124, %v2135, %v2137
        %v2142 = vsel %vm524, %v2138, 0.0
        %v2143 = vsel %vm525, %v2139, 0.0
        %s2144 = scalar_lea.vmem %s4, 32
        %v2145 = vld [vmem:[%s2144] sm:$0xf]
        %v2147 = vsel %vm1298, %v2145, 0
        %v2150 = vsel %vm1302, %v2142, 0
        %v2153 = vsel %vm1302, %v2143, 0
        %2155 = vmatprep.subr.mxu0 %v2153
        %2156 = vmatpush1.msra.mxu0 %v2150
        %2157 = vmatprep.subr.mxu0 0.0
        %2158 = vmatpush1.msra.mxu0 0.0
        %2159 = vmatprep.subr.mxu0 0.0
        %2160 = vmatpush1.msra.mxu0 0.0
        %2161 = vmatprep.subr.mxu0 0.0
        %2162 = vmatpush1.msra.mxu0 0.0
        %2163 = vmatprep.subr.mxu0 0.0
        %2164 = vmatpush1.msra.mxu0 0.0
        %2165 = vmatprep.subr.mxu0 0.0
        %2166 = vmatpush1.msra.mxu0 0.0
        %2167 = vmatprep.subr.mxu0 0.0
        %2168 = vmatpush1.msra.mxu0 0.0
        %2169 = vmatprep.subr.mxu0 0.0
        %2170 = vmatpush1.msra.mxu0 0.0
        %2171 = vmatprep.subr.mxu0 0.0
        %2172 = vmatpush1.msra.mxu0 0.0
        %2173 = vmatprep.subr.mxu0 0.0
        %2174 = vmatpush1.msra.mxu0 0.0
        %2175 = vmatprep.subr.mxu0 0.0
        %2176 = vmatpush1.msra.mxu0 0.0
        %2177 = vmatprep.subr.mxu0 0.0
        %2178 = vmatpush1.msra.mxu0 0.0
        %2179 = vmatprep.subr.mxu0 0.0
        %2180 = vmatpush1.msra.mxu0 0.0
        %2181 = vmatprep.subr.mxu0 0.0
        %2182 = vmatpush1.msra.mxu0 0.0
        %2183 = vmatprep.subr.mxu0 0.0
        %2184 = vmatpush1.msra.mxu0 0.0
        %2185 = vmatprep.subr.mxu0 0.0
        %2186 = vmatpush1.msra.mxu0 0.0
        %2187 = vmatprep.subr.mxu0 0.0
        %2188 = vmatpush1.msra.mxu0 0.0
        %2189 = vmatprep.subr.mxu0 0.0
        %2190 = vmatpush1.msra.mxu0 0.0
        %2191 = vmatprep.subr.mxu0 0.0
        %2192 = vmatpush1.msra.mxu0 0.0
        %2193 = vmatprep.subr.mxu0 0.0
        %2194 = vmatpush1.msra.mxu0 0.0
        %2195 = vmatprep.subr.mxu0 0.0
        %2196 = vmatpush1.msra.mxu0 0.0
        %2197 = vmatprep.subr.mxu0 0.0
        %2198 = vmatpush1.msra.mxu0 0.0
        %2199 = vmatprep.subr.mxu0 0.0
        %2200 = vmatpush1.msra.mxu0 0.0
        %2201 = vmatprep.subr.mxu0 0.0
        %2202 = vmatpush1.msra.mxu0 0.0
        %2203 = vmatprep.subr.mxu0 0.0
        %2204 = vmatpush1.msra.mxu0 0.0
        %2205 = vmatprep.subr.mxu0 0.0
        %2206 = vmatpush1.msra.mxu0 0.0
        %2207 = vmatprep.subr.mxu0 0.0
        %2208 = vmatpush1.msra.mxu0 0.0
        %2209 = vmatprep.subr.mxu0 0.0
        %2210 = vmatpush1.msra.mxu0 0.0
        %2211 = vmatprep.subr.mxu0 0.0
        %2212 = vmatpush1.msra.mxu0 0.0
        %2213 = vmatprep.subr.mxu0 0.0
        %2214 = vmatpush1.msra.mxu0 0.0
        %2215 = vmatprep.subr.mxu0 0.0
        %2216 = vmatpush1.msra.mxu0 0.0
        %2217 = vmatprep.subr.mxu0 0.0
        %2218 = vmatpush1.msra.mxu0 0.0
        %2219 = vmatprep.mubr.f32.mxu0 0.0
        %2220 = vmatmul.mubr.f32.gmra.mrb[0].mxu0 %v2147
        %v2221 = vpop.f32.mrb[0].mxu0
        %v2222 = vadd.f32 0.0, %v2221
        %v2223 = vpop.f32.mrb[0].mxu0
        %v2224 = vadd.f32 0.0, %v2223
        %2225 = vdwg.mxu0
        %v2226 = vadd.f32 %v2112, %v2222
        %v2227 = vadd.f32 %v2113, %v2224
        %v2228 = vld [vmem:[%s5] sm:$0xf]
        %2230 = vset.pattern.permute.xlu0 0
        %2231 = vperm.xlu0 %2230, %v2228
        %v2232 = vpop.permute.xlu0 %2231
        %v2234 = vmul.f32 %v2226, %v2232
        %v2235 = vmul.f32 %v2227, %v2232
        %v2236 = vld [vmem:[%s6] sm:$0xf]
        %2238 = vset.pattern.permute.xlu0 0
        %2239 = vperm.xlu0 %2238, %v2236
        %v2240 = vpop.permute.xlu0 %2239
        %v2242 = vadd.f32 %v2234, %v2240
        %v2243 = vadd.f32 %v2235, %v2240
        %v2244 = vxor.u32 %v2242, 2147483648
        %v2245 = vxor.u32 %v2243, 2147483648
        %v2246 = vmul.f32 %v2244, 1.442695
        %v2247 = vpow.pop %v2246
        %v2248 = vmul.f32 %v2245, 1.442695
        %v2249 = vpow.pop %v2248
        %v2250 = vadd.f32 %v2247, 1.0
        %v2251 = vadd.f32 %v2249, 1.0
        %v2252 = vrcp.pop %v2250
        %v2253 = vmul.f32 1.0, %v2252
        %v2254 = vrcp.pop %v2251
        %v2255 = vmul.f32 1.0, %v2254
        %v2256 = vmul.f32 %v2242, %v2253
        %v2257 = vmul.f32 %v2243, %v2255
        %v2258 = vld [vmem:[%s276] sm:$0xff]
        %v2260 = vcombine.high %v2258, %v2258
        %v2262 = vadd.f32 %v2256, %v2258
        %v2263 = vadd.f32 %v2257, %v2260
        %v2266 = vcombine.low %v2262, %v2263
        %2268 = vst [vmem:[%s271] sm:$0xff] %v2266
        %s2269 = sand.u32 %s181, 1
        %s2270 = scalar_lea.sflag [#allocation5], %s2269
        %s2271 = sand.u32 %s181, 1
        %s2272 = smul.addr %s2271, 8
        %s2273 = scalar_lea.vmem [#allocation4], %s2272
        // Predicated region
        $region49: #{tpu_custom_call.1} parent=47 // pred_check
          %p2274 = pneg %p191
        $region50: #{tpu_custom_call.1} parent=47 // pred_check_branch
          %2276 = sbr.rel (%p2274) target = $region52
        $region51: #{tpu_custom_call.1} parent=47 // pred_region
          %s2278 = ssub.s32 128, 128
          %2279 = vsyncadd %s2270, %s2278
          %s2280 = smul.addr %s21, 2
          %s2281 = smul.addr %s2280, 64
          %s2282 = scalar_lea.hbm %s7, %s2281
          %s2284 = sshll.u32 %s2273, 4
          %s2285 = int_to_ptr.vmem [resolvable:$true] %s2284
          %2287 = dma.vmem_to_hbm [thread:$0]  %s2285, 128, %s2282, %s2270
        $region52: #{tpu_custom_call.1} parent=47 // pred_fallthru
          _
      $region48: #{tpu_custom_call.1} parent=5 // pred_fallthru
        _
      %p2288 = scmp.le.s32.totalorder 2, %s16
      // Predicated region
      $region53: #{tpu_custom_call.1} parent=5 // pred_check
        %p2289 = pneg %p2288
      $region54: #{tpu_custom_call.1} parent=5 // pred_check_branch
        %2291 = sbr.rel (%p2289) target = $region56
      $region55: #{tpu_custom_call.1} parent=5 // pred_region
        %s2292 = ssub.s32 %s16, 2
        // Predicated region
        $region57: #{tpu_custom_call.1} parent=55 // pred_check
          %p2293 = pneg %p197
        $region58: #{tpu_custom_call.1} parent=55 // pred_check_branch
          %2295 = sbr.rel (%p2293) target = $region60
        $region59: #{tpu_custom_call.1} parent=55 // pred_region
          %s2296 = sand.u32 %s182, 1
          %s2297 = scalar_lea.sflag [#allocation5], %s2296
          %s2298 = sand.u32 %s182, 1
          %s2299 = smul.addr %s2298, 8
          %s2300 = scalar_lea.vmem [#allocation4], %s2299
          %2301 = dma.done %s2297, 128
        $region60: #{tpu_custom_call.1} parent=55 // pred_fallthru
          _
      $region56: #{tpu_custom_call.1} parent=5 // pred_fallthru
        _
    $region6: #{tpu_custom_call.1} parent=1 // loop_footer
      %s20 = sadd.s32 1, %s16
    $region7: #{tpu_custom_call.1} parent=1 // loop_footer_branch
      %15 = sbr.rel target = $region3
    $region8: #{tpu_custom_call.1} parent=1 // loop_exit
      _
    %2302 = vsyncpa [#allocation5], 1
    %s2303 = scalar_lea.sflag [#allocation5], 1
    %2304 = vsyncpa %s2303, 1

</llo_original>
